<compile_context>
chip_gen: v7x
topology: tpu7x:2x2x1
jax: 0.10.0
libtpu: 0.0.40
codegen_flags: <defaults>
</compile_context>

<pallas_src>
import numpy as np
import jax
import jax.numpy as jnp
from jax.experimental import pallas as pl
from jax.experimental.pallas import tpu as pltpu

VAR_EPS = 1e-5          # PNA 'std' aggregator epsilon
_BIG = 1e30             # pad value for masked min/max
HIGHEST = jax.lax.Precision.HIGHEST


# ------------------------------ Pallas kernel ------------------------------ #

def bhs_pna_kernel(x_ref, wp_ref, gd_ref, gs_ref, eterm_ref, scat_ref,
                   degc_ref, wconv_ref, wav_ref, w2_ref, w3_ref, gq_ref,
                   bias_ref, out_ref):
    """Fused PNAConv + relu + dueling head.  Node rows are NODE-MAJOR
    (row = n*B + b) so the flatten-to-(B, N*C) never has to materialise."""
    f32 = jnp.float32
    ntot, f = x_ref.shape
    n_edges = eterm_ref.shape[0]
    c_out = wconv_ref.shape[1] // 3
    batch = out_ref.shape[0]
    n_nodes = ntot // batch
    av_width = wav_ref.shape[1]
    v_hidden = w2_ref.shape[0]
    num_adv = gq_ref.shape[0]

    x = x_ref[...]                                                  # (Ntot, F)

    # Project node features once for both edge roles: [dst-proj | src-proj].
    p = jnp.dot(x, wp_ref[...], preferred_element_type=f32)         # (Ntot, 2F)

    # Per-edge messages via one-hot gather matmuls (MXU) + constant edge term.
    msg = (jnp.dot(gd_ref[...], p[:, 0:f], preferred_element_type=f32)
           + jnp.dot(gs_ref[...], p[:, f:2 * f], preferred_element_type=f32)
           + eterm_ref[...])                                         # (E, F)

    # sum / sum-of-squares aggregation as scatter matmuls (MXU).
    scat = scat_ref[...]                                             # (Ntot, E)
    s1 = jnp.dot(scat, msg, preferred_element_type=f32)              # (Ntot, F)
    s2 = jnp.dot(scat, msg * msg, preferred_element_type=f32)        # (Ntot, F)

    # min / max: static per-edge register combines (no refs, no stores).
    pad = (1.0 - scat) * _BIG                                        # 0 on own edges
    mn = jnp.full((ntot, f), _BIG, f32)
    mx = jnp.full((ntot, f), -_BIG, f32)
    for e in range(n_edges):
        m_e = msg[e:e + 1, :]                                        # (1, F)
        p_e = pad[:, e:e + 1]                                        # (Ntot, 1)
        mn = jnp.minimum(mn, m_e + p_e)
        mx = jnp.maximum(mx, m_e - p_e)

    # Degree-derived per-node constants (precomputed host-side).
    degc = degc_ref[...]                                             # (Ntot, 4)
    inv_deg = degc[:, 0:1]
    s_amp = degc[:, 1:2]
    s_att = degc[:, 2:3]
    has_edge = degc[:, 3:4]

    mean = s1 * inv_deg
    var = s2 * inv_deg - mean * mean
    std = jnp.sqrt(jnp.maximum(var, 0.0) + VAR_EPS)
    mn = jnp.where(has_edge > 0.0, mn, 0.0)
    mx = jnp.where(has_edge > 0.0, mx, 0.0)

    # conv = [x | agg | agg*amp | agg*att] @ Wconv + b, with the per-row
    # scalers pulled out of the matmul (no 13F concat materialised).
    feat = jnp.concatenate([x, mean, mn, mx, std], axis=1)           # (Ntot, 5F)
    pr = jnp.dot(feat, wconv_ref[...], preferred_element_type=f32)   # (Ntot, 3C)
    conv = (pr[:, 0:c_out]
            + s_amp * pr[:, c_out:2 * c_out]
            + s_att * pr[:, 2 * c_out:3 * c_out]
            + bias_ref[0:1, 0:c_out])
    conv = jnp.maximum(conv, 0.0)                                    # (Ntot, C)

    # Dueling head: contract over (node, channel) without flattening —
    # node-major ordering makes this N static (B, C) @ (C, AV) matmuls.
    av = jnp.zeros((batch, av_width), f32)
    for n in range(n_nodes):
        av = av + jnp.dot(conv[n * batch:(n + 1) * batch, :],
                          wav_ref[n * c_out:(n + 1) * c_out, :],
                          preferred_element_type=f32)
    av = av + bias_ref[1:2, 0:av_width]

    adv = jnp.maximum(av[:, 0:num_adv], 0.0)
    v = jnp.maximum(av[:, num_adv:av_width], 0.0)
    v = jnp.maximum(jnp.dot(v, w2_ref[...], preferred_element_type=f32)
                    + bias_ref[2:3, 0:v_hidden], 0.0)
    val = jnp.dot(v, w3_ref[...], preferred_element_type=f32) + bias_ref[3:4, 0:1]

    # q = val + adv - group_mean(adv) as one matmul against the pre-fused
    # (I - group_mean) matrix, padded to a lane-dense width -> ONE store.
    out_ref[...] = val + jnp.dot(adv, gq_ref[...], preferred_element_type=f32)


# --------------------------------- wrapper --------------------------------- #

def bhs_pna_forward(x, params, edge_index, edge_attr, num_actions):
    batch, n_nodes, f = x.shape
    ntot = batch * n_nodes
    c_out = params['w_lin'].shape[0]

    src = np.asarray(edge_index[0]).astype(np.int64)
    dst = np.asarray(edge_index[1]).astype(np.int64)
    n_edges = src.shape[0]

    # Node-major permutation: permuted row of (b, n) is n*B + b.  Edges only
    # reference flat ids 0..N-1 (batch 0) -> permuted row id*B.
    x_perm = jnp.transpose(x, (1, 0, 2)).reshape(ntot, f).astype(jnp.float32)
    p_dst = dst * batch
    p_src = src * batch

    # One-hot gather / scatter matrices for the static topology (host-side).
    gd = np.zeros((n_edges, ntot), np.float32)
    gd[np.arange(n_edges), p_dst] = 1.0
    gs = np.zeros((n_edges, ntot), np.float32)
    gs[np.arange(n_edges), p_src] = 1.0
    scat = np.ascontiguousarray(gd.T)                                # (Ntot, E)

    # Degree-derived per-node constants (host-side, trace-time work).
    cnt = np.zeros((ntot,), np.float64)
    np.add.at(cnt, p_dst, 1.0)
    indeg_tmpl = np.bincount(dst, minlength=n_nodes).astype(np.float64)
    avg_log = float(np.mean(np.log(indeg_tmpl + 1.0)))
    deg = np.maximum(cnt, 1.0)
    log_deg = np.log(deg + 1.0)
    degc = np.stack([1.0 / deg,
                     log_deg / avg_log,
                     avg_log / log_deg,
                     (cnt > 0.0).astype(np.float64)], axis=1).astype(np.float32)

    # One-time algebraic parameter fusion (init-time work, not per-step).
    w_pre = params['w_pre']
    wp = jnp.concatenate([w_pre[0:f], w_pre[f:2 * f]], axis=1)       # (F, 2F)
    enc = jnp.dot(edge_attr, params['w_enc'], precision=HIGHEST) + params['b_enc']
    eterm = jnp.dot(enc, w_pre[2 * f:3 * f], precision=HIGHEST) + params['b_pre']
    w_conv = jnp.dot(params['w_post'], params['w_lin'], precision=HIGHEST)
    b_conv = jnp.dot(params['b_post'], params['w_lin'], precision=HIGHEST) + params['b_lin']
    # Split w_conv into [x | identity | amplification | attenuation] blocks.
    wconv_f = jnp.zeros((5 * f, 3 * c_out), jnp.float32)
    wconv_f = wconv_f.at[0:f, 0:c_out].set(w_conv[0:f])
    wconv_f = wconv_f.at[f:5 * f, 0:c_out].set(w_conv[f:5 * f])
    wconv_f = wconv_f.at[f:5 * f, c_out:2 * c_out].set(w_conv[5 * f:9 * f])
    wconv_f = wconv_f.at[f:5 * f, 2 * c_out:3 * c_out].set(w_conv[9 * f:13 * f])

    n_groups = len(num_actions)
    num_adv = int(sum(num_actions))
    group_size = num_adv // n_groups
    v_hidden = params['w2'].shape[0]
    av_width = num_adv + v_hidden
    wav = jnp.concatenate([params['wa'], params['w1']], axis=1)      # (N*C, AV)
    bav = jnp.concatenate([params['ba'], params['b1']], axis=1)

    # (I - group_mean) fused + padded to a lane-dense output width.
    out_w = max(128, ((num_adv + 127) // 128) * 128)
    gm = np.zeros((num_adv, num_adv), np.float32)
    for g in range(n_groups):
        gm[g * group_size:(g + 1) * group_size,
           g * group_size:(g + 1) * group_size] = 1.0 / group_size
    gq = np.zeros((num_adv, out_w), np.float32)
    gq[:, :num_adv] = np.eye(num_adv, dtype=np.float32) - gm

    # Pack the small bias vectors into one (4, 128) VMEM tile.
    bias_w = max(c_out, av_width, v_hidden, 128)
    bias_pack = jnp.zeros((4, bias_w), jnp.float32)
    bias_pack = bias_pack.at[0, :c_out].set(b_conv[0])
    bias_pack = bias_pack.at[1, :av_width].set(bav[0])
    bias_pack = bias_pack.at[2, :v_hidden].set(params['b2'][0])
    bias_pack = bias_pack.at[3, :1].set(params['b3'][0])

    vmem = pl.BlockSpec(memory_space=pltpu.MemorySpace.VMEM)
    q_pad = pl.pallas_call(
        bhs_pna_kernel,
        out_shape=jax.ShapeDtypeStruct((batch, out_w), jnp.float32),
        in_specs=[vmem] * 13,
        out_specs=vmem,
    )(x_perm, wp, jnp.asarray(gd), jnp.asarray(gs), eterm, jnp.asarray(scat),
      jnp.asarray(degc), wconv_f, wav, params['w2'], params['w3'],
      jnp.asarray(gq), bias_pack)

    return q_pad[:, :num_adv].reshape(batch, n_groups, group_size)


# ----------------------------- pure-JAX reference --------------------------- #

def reference_forward(x, params, edge_index, edge_attr, num_actions):
    batch, n_nodes, f = x.shape
    ntot = batch * n_nodes
    xf = x.reshape(ntot, f)
    src, dst = edge_index[0], edge_index[1]

    indeg = np.bincount(np.asarray(dst), minlength=n_nodes).astype(np.float64)
    avg_log = float(np.mean(np.log(indeg + 1.0)))

    enc = edge_attr @ params['w_enc'] + params['b_enc']
    z = jnp.concatenate([xf[dst], xf[src], enc], axis=-1)
    msg = z @ params['w_pre'] + params['b_pre']

    ones = jnp.ones((msg.shape[0],), jnp.float32)
    cnt = jax.ops.segment_sum(ones, dst, num_segments=ntot)[:, None]
    deg = jnp.maximum(cnt, 1.0)
    mean = jax.ops.segment_sum(msg, dst, num_segments=ntot) / deg
    mean_sq = jax.ops.segment_sum(msg * msg, dst, num_segments=ntot) / deg
    var = mean_sq - mean * mean
    std = jnp.sqrt(jnp.maximum(var, 0.0) + VAR_EPS)
    mn = jnp.where(cnt > 0, jax.ops.segment_min(msg, dst, num_segments=ntot), 0.0)
    mx = jnp.where(cnt > 0, jax.ops.segment_max(msg, dst, num_segments=ntot), 0.0)
    agg = jnp.concatenate([mean, mn, mx, std], axis=-1)
    log_deg = jnp.log(deg + 1.0)
    agg = jnp.concatenate(
        [agg, agg * (log_deg / avg_log), agg * (avg_log / log_deg)], axis=-1)

    out = jnp.concatenate([xf, agg], axis=-1)
    out = out @ params['w_post'] + params['b_post']
    out = out @ params['w_lin'] + params['b_lin']
    h = jnp.maximum(out, 0.0).reshape(batch, -1)

    adv = jnp.maximum(h @ params['wa'] + params['ba'], 0.0)
    v = jnp.maximum(h @ params['w1'] + params['b1'], 0.0)
    v = jnp.maximum(v @ params['w2'] + params['b2'], 0.0)
    val = v @ params['w3'] + params['b3']                            # (B, 1)
    n_groups = len(num_actions)
    num_adv = sum(num_actions)
    adv3 = adv.reshape(batch, n_groups, num_adv // n_groups)
    return val[:, :, None] + adv3 - adv3.mean(-1, keepdims=True)


# ------------------------------------ main ---------------------------------- #

def _lin_init(kw, kb, fan_in, fan_out):
    bound = 1.0 / (fan_in ** 0.5)
    w = jax.random.uniform(kw, (fan_in, fan_out), jnp.float32, -bound, bound)
    b = jax.random.uniform(kb, (1, fan_out), jnp.float32, -bound, bound)
    return w, b


if __name__ == "__main__":
    # Small shapes consistent with the module: N=8 nodes, in_channels=8,
    # out_channels=128, edge_dim=1, batch=2, num_actions=(8, 8).
    N, C_IN, C_OUT, EDGE_DIM = 8, 8, 128, 1
    B = 2
    num_actions = (8, 8)   # TODO(synk): equal group sizes assumed (as the torch .view requires)

    keys = jax.random.split(jax.random.PRNGKey(0), 20)

    src = jnp.array([0, 1, 2, 3, 4, 5, 6, 7, 0, 2, 4, 6], dtype=jnp.int32)
    dst = jnp.array([1, 2, 3, 4, 5, 6, 7, 0, 4, 6, 0, 2], dtype=jnp.int32)
    edge_index = jnp.stack([src, dst])                               # (2, E)
    E = src.shape[0]
    edge_attr = jax.random.normal(keys[0], (E, EDGE_DIM), dtype=jnp.float32)
    x = jax.random.normal(keys[1], (B, N, C_IN), dtype=jnp.float32)

    F = C_IN
    feat = N * C_OUT
    A = sum(num_actions)

    w_enc, b_enc = _lin_init(keys[2], keys[3], EDGE_DIM, F)          # edge_encoder
    w_pre, b_pre = _lin_init(keys[4], keys[5], 3 * F, F)             # pre_nn
    w_post, b_post = _lin_init(keys[6], keys[7], 13 * F, C_OUT)      # post_nn
    w_lin, b_lin = _lin_init(keys[8], keys[9], C_OUT, C_OUT)         # PNA out lin
    wa, ba = _lin_init(keys[10], keys[11], feat, A)                  # adv
    w1, b1 = _lin_init(keys[12], keys[13], feat, 64)                 # val1
    w2, b2 = _lin_init(keys[14], keys[15], 64, 64)                   # val2
    w3, b3 = _lin_init(keys[16], keys[17], 64, 1)                    # val3

    params = dict(w_enc=w_enc, b_enc=b_enc, w_pre=w_pre, b_pre=b_pre,
                  w_post=w_post, b_post=b_post, w_lin=w_lin, b_lin=b_lin,
                  wa=wa, ba=ba, w1=w1, b1=b1, w2=w2, b2=b2, w3=w3, b3=b3)

    out = bhs_pna_forward(x, params, edge_index, edge_attr, num_actions)
    out = jax.block_until_ready(out)

    ref = reference_forward(x, params, edge_index, edge_attr, num_actions)
    assert out.shape == (B, len(num_actions), A // len(num_actions))
    err = float(jnp.max(jnp.abs(out - ref)))
    assert jnp.allclose(out, ref, atol=2e-4, rtol=2e-4), f"mismatch, max err {err}"

    print("KERNEL_OK")
</pallas_src>

<mosaic_0001>
module attributes {stable_mosaic.version = 11 : i64} {
  func.func @bhs_pna_kernel(%arg0: memref<16x8xf32, #tpu.memory_space<vmem>>, %arg1: memref<8x16xf32, #tpu.memory_space<vmem>>, %arg2: memref<12x16xf32, #tpu.memory_space<vmem>>, %arg3: memref<12x16xf32, #tpu.memory_space<vmem>>, %arg4: memref<12x8xf32, #tpu.memory_space<vmem>>, %arg5: memref<16x12xf32, #tpu.memory_space<vmem>>, %arg6: memref<16x4xf32, #tpu.memory_space<vmem>>, %arg7: memref<40x384xf32, #tpu.memory_space<vmem>>, %arg8: memref<1024x80xf32, #tpu.memory_space<vmem>>, %arg9: memref<64x64xf32, #tpu.memory_space<vmem>>, %arg10: memref<64x1xf32, #tpu.memory_space<vmem>>, %arg11: memref<16x128xf32, #tpu.memory_space<vmem>>, %arg12: memref<4x128xf32, #tpu.memory_space<vmem>>, %arg13: memref<2x128xf32, #tpu.memory_space<vmem>>) attributes {dimension_semantics = [], scalar_prefetch = 0 : i64, scratch_operands = 0 : i64, tpu.core_type = #tpu.core_type<tc>} {
    %c0 = arith.constant 0 : index
    %c0_0 = arith.constant 0 : index
    %0 = vector.load %arg0[%c0, %c0_0] : memref<16x8xf32, #tpu.memory_space<vmem>>, vector<16x8xf32>
    %c0_1 = arith.constant 0 : index
    %c0_2 = arith.constant 0 : index
    %1 = vector.load %arg1[%c0_1, %c0_2] : memref<8x16xf32, #tpu.memory_space<vmem>>, vector<8x16xf32>
    %cst = arith.constant dense<0.000000e+00> : vector<16x16xf32>
    %2 = tpu.matmul %0, %1, %cst {dimension_numbers = #tpu.dot_dimension_numbers<[1], [0], [0], [1], [0, 0, 1, 1], [], []>} : vector<16x8xf32>, vector<8x16xf32>, vector<16x16xf32> -> vector<16x16xf32>
    %c0_3 = arith.constant 0 : index
    %c0_4 = arith.constant 0 : index
    %3 = vector.load %arg2[%c0_3, %c0_4] : memref<12x16xf32, #tpu.memory_space<vmem>>, vector<12x16xf32>
    %4 = vector.extract_strided_slice %2 {offsets = [0, 0], sizes = [16, 8], strides = [1, 1]} : vector<16x16xf32> to vector<16x8xf32>
    %cst_5 = arith.constant dense<0.000000e+00> : vector<12x8xf32>
    %5 = tpu.matmul %3, %4, %cst_5 {dimension_numbers = #tpu.dot_dimension_numbers<[1], [0], [0], [1], [0, 0, 1, 1], [], []>} : vector<12x16xf32>, vector<16x8xf32>, vector<12x8xf32> -> vector<12x8xf32>
    %c0_6 = arith.constant 0 : index
    %c0_7 = arith.constant 0 : index
    %6 = vector.load %arg3[%c0_6, %c0_7] : memref<12x16xf32, #tpu.memory_space<vmem>>, vector<12x16xf32>
    %7 = vector.extract_strided_slice %2 {offsets = [0, 8], sizes = [16, 8], strides = [1, 1]} : vector<16x16xf32> to vector<16x8xf32>
    %cst_8 = arith.constant dense<0.000000e+00> : vector<12x8xf32>
    %8 = tpu.matmul %6, %7, %cst_8 {dimension_numbers = #tpu.dot_dimension_numbers<[1], [0], [0], [1], [0, 0, 1, 1], [], []>} : vector<12x16xf32>, vector<16x8xf32>, vector<12x8xf32> -> vector<12x8xf32>
    %9 = arith.addf %5, %8 : vector<12x8xf32>
    %c0_9 = arith.constant 0 : index
    %c0_10 = arith.constant 0 : index
    %10 = vector.load %arg4[%c0_9, %c0_10] : memref<12x8xf32, #tpu.memory_space<vmem>>, vector<12x8xf32>
    %11 = arith.addf %9, %10 : vector<12x8xf32>
    %c0_11 = arith.constant 0 : index
    %c0_12 = arith.constant 0 : index
    %12 = vector.load %arg5[%c0_11, %c0_12] : memref<16x12xf32, #tpu.memory_space<vmem>>, vector<16x12xf32>
    %cst_13 = arith.constant dense<0.000000e+00> : vector<16x8xf32>
    %13 = tpu.matmul %12, %11, %cst_13 {dimension_numbers = #tpu.dot_dimension_numbers<[1], [0], [0], [1], [0, 0, 1, 1], [], []>} : vector<16x12xf32>, vector<12x8xf32>, vector<16x8xf32> -> vector<16x8xf32>
    %14 = arith.mulf %11, %11 : vector<12x8xf32>
    %cst_14 = arith.constant dense<0.000000e+00> : vector<16x8xf32>
    %15 = tpu.matmul %12, %14, %cst_14 {dimension_numbers = #tpu.dot_dimension_numbers<[1], [0], [0], [1], [0, 0, 1, 1], [], []>} : vector<16x12xf32>, vector<12x8xf32>, vector<16x8xf32> -> vector<16x8xf32>
    %cst_15 = arith.constant 1.000000e+00 : f32
    %16 = vector.broadcast %cst_15 : f32 to vector<16x12xf32>
    %17 = arith.subf %16, %12 : vector<16x12xf32>
    %cst_16 = arith.constant 1.000000e+30 : f32
    %18 = vector.broadcast %cst_16 : f32 to vector<16x12xf32>
    %19 = arith.mulf %17, %18 : vector<16x12xf32>
    %cst_17 = arith.constant 1.000000e+30 : f32
    %20 = vector.broadcast %cst_17 : f32 to vector<16x8xf32>
    %cst_18 = arith.constant -1.000000e+30 : f32
    %21 = vector.broadcast %cst_18 : f32 to vector<16x8xf32>
    %22 = vector.extract_strided_slice %11 {offsets = [0, 0], sizes = [1, 8], strides = [1, 1]} : vector<12x8xf32> to vector<1x8xf32>
    %23 = vector.extract_strided_slice %19 {offsets = [0, 0], sizes = [16, 1], strides = [1, 1]} : vector<16x12xf32> to vector<16x1xf32>
    %24 = vector.broadcast %22 : vector<1x8xf32> to vector<16x8xf32>
    %25 = vector.broadcast %23 : vector<16x1xf32> to vector<16x8xf32>
    %26 = arith.addf %24, %25 : vector<16x8xf32>
    %27 = arith.minimumf %20, %26 : vector<16x8xf32>
    %28 = vector.broadcast %22 : vector<1x8xf32> to vector<16x8xf32>
    %29 = vector.broadcast %23 : vector<16x1xf32> to vector<16x8xf32>
    %30 = arith.subf %28, %29 : vector<16x8xf32>
    %31 = arith.maximumf %21, %30 : vector<16x8xf32>
    %32 = vector.extract_strided_slice %11 {offsets = [1, 0], sizes = [1, 8], strides = [1, 1]} : vector<12x8xf32> to vector<1x8xf32>
    %33 = vector.extract_strided_slice %19 {offsets = [0, 1], sizes = [16, 1], strides = [1, 1]} : vector<16x12xf32> to vector<16x1xf32>
    %34 = vector.broadcast %32 : vector<1x8xf32> to vector<16x8xf32>
    %35 = vector.broadcast %33 : vector<16x1xf32> to vector<16x8xf32>
    %36 = arith.addf %34, %35 : vector<16x8xf32>
    %37 = arith.minimumf %27, %36 : vector<16x8xf32>
    %38 = vector.broadcast %32 : vector<1x8xf32> to vector<16x8xf32>
    %39 = vector.broadcast %33 : vector<16x1xf32> to vector<16x8xf32>
    %40 = arith.subf %38, %39 : vector<16x8xf32>
    %41 = arith.maximumf %31, %40 : vector<16x8xf32>
    %42 = vector.extract_strided_slice %11 {offsets = [2, 0], sizes = [1, 8], strides = [1, 1]} : vector<12x8xf32> to vector<1x8xf32>
    %43 = vector.extract_strided_slice %19 {offsets = [0, 2], sizes = [16, 1], strides = [1, 1]} : vector<16x12xf32> to vector<16x1xf32>
    %44 = vector.broadcast %42 : vector<1x8xf32> to vector<16x8xf32>
    %45 = vector.broadcast %43 : vector<16x1xf32> to vector<16x8xf32>
    %46 = arith.addf %44, %45 : vector<16x8xf32>
    %47 = arith.minimumf %37, %46 : vector<16x8xf32>
    %48 = vector.broadcast %42 : vector<1x8xf32> to vector<16x8xf32>
    %49 = vector.broadcast %43 : vector<16x1xf32> to vector<16x8xf32>
    %50 = arith.subf %48, %49 : vector<16x8xf32>
    %51 = arith.maximumf %41, %50 : vector<16x8xf32>
    %52 = vector.extract_strided_slice %11 {offsets = [3, 0], sizes = [1, 8], strides = [1, 1]} : vector<12x8xf32> to vector<1x8xf32>
    %53 = vector.extract_strided_slice %19 {offsets = [0, 3], sizes = [16, 1], strides = [1, 1]} : vector<16x12xf32> to vector<16x1xf32>
    %54 = vector.broadcast %52 : vector<1x8xf32> to vector<16x8xf32>
    %55 = vector.broadcast %53 : vector<16x1xf32> to vector<16x8xf32>
    %56 = arith.addf %54, %55 : vector<16x8xf32>
    %57 = arith.minimumf %47, %56 : vector<16x8xf32>
    %58 = vector.broadcast %52 : vector<1x8xf32> to vector<16x8xf32>
    %59 = vector.broadcast %53 : vector<16x1xf32> to vector<16x8xf32>
    %60 = arith.subf %58, %59 : vector<16x8xf32>
    %61 = arith.maximumf %51, %60 : vector<16x8xf32>
    %62 = vector.extract_strided_slice %11 {offsets = [4, 0], sizes = [1, 8], strides = [1, 1]} : vector<12x8xf32> to vector<1x8xf32>
    %63 = vector.extract_strided_slice %19 {offsets = [0, 4], sizes = [16, 1], strides = [1, 1]} : vector<16x12xf32> to vector<16x1xf32>
    %64 = vector.broadcast %62 : vector<1x8xf32> to vector<16x8xf32>
    %65 = vector.broadcast %63 : vector<16x1xf32> to vector<16x8xf32>
    %66 = arith.addf %64, %65 : vector<16x8xf32>
    %67 = arith.minimumf %57, %66 : vector<16x8xf32>
    %68 = vector.broadcast %62 : vector<1x8xf32> to vector<16x8xf32>
    %69 = vector.broadcast %63 : vector<16x1xf32> to vector<16x8xf32>
    %70 = arith.subf %68, %69 : vector<16x8xf32>
    %71 = arith.maximumf %61, %70 : vector<16x8xf32>
    %72 = vector.extract_strided_slice %11 {offsets = [5, 0], sizes = [1, 8], strides = [1, 1]} : vector<12x8xf32> to vector<1x8xf32>
    %73 = vector.extract_strided_slice %19 {offsets = [0, 5], sizes = [16, 1], strides = [1, 1]} : vector<16x12xf32> to vector<16x1xf32>
    %74 = vector.broadcast %72 : vector<1x8xf32> to vector<16x8xf32>
    %75 = vector.broadcast %73 : vector<16x1xf32> to vector<16x8xf32>
    %76 = arith.addf %74, %75 : vector<16x8xf32>
    %77 = arith.minimumf %67, %76 : vector<16x8xf32>
    %78 = vector.broadcast %72 : vector<1x8xf32> to vector<16x8xf32>
    %79 = vector.broadcast %73 : vector<16x1xf32> to vector<16x8xf32>
    %80 = arith.subf %78, %79 : vector<16x8xf32>
    %81 = arith.maximumf %71, %80 : vector<16x8xf32>
    %82 = vector.extract_strided_slice %11 {offsets = [6, 0], sizes = [1, 8], strides = [1, 1]} : vector<12x8xf32> to vector<1x8xf32>
    %83 = vector.extract_strided_slice %19 {offsets = [0, 6], sizes = [16, 1], strides = [1, 1]} : vector<16x12xf32> to vector<16x1xf32>
    %84 = vector.broadcast %82 : vector<1x8xf32> to vector<16x8xf32>
    %85 = vector.broadcast %83 : vector<16x1xf32> to vector<16x8xf32>
    %86 = arith.addf %84, %85 : vector<16x8xf32>
    %87 = arith.minimumf %77, %86 : vector<16x8xf32>
    %88 = vector.broadcast %82 : vector<1x8xf32> to vector<16x8xf32>
    %89 = vector.broadcast %83 : vector<16x1xf32> to vector<16x8xf32>
    %90 = arith.subf %88, %89 : vector<16x8xf32>
    %91 = arith.maximumf %81, %90 : vector<16x8xf32>
    %92 = vector.extract_strided_slice %11 {offsets = [7, 0], sizes = [1, 8], strides = [1, 1]} : vector<12x8xf32> to vector<1x8xf32>
    %93 = vector.extract_strided_slice %19 {offsets = [0, 7], sizes = [16, 1], strides = [1, 1]} : vector<16x12xf32> to vector<16x1xf32>
    %94 = vector.broadcast %92 : vector<1x8xf32> to vector<16x8xf32>
    %95 = vector.broadcast %93 : vector<16x1xf32> to vector<16x8xf32>
    %96 = arith.addf %94, %95 : vector<16x8xf32>
    %97 = arith.minimumf %87, %96 : vector<16x8xf32>
    %98 = vector.broadcast %92 : vector<1x8xf32> to vector<16x8xf32>
    %99 = vector.broadcast %93 : vector<16x1xf32> to vector<16x8xf32>
    %100 = arith.subf %98, %99 : vector<16x8xf32>
    %101 = arith.maximumf %91, %100 : vector<16x8xf32>
    %102 = vector.extract_strided_slice %11 {offsets = [8, 0], sizes = [1, 8], strides = [1, 1]} : vector<12x8xf32> to vector<1x8xf32>
    %103 = vector.extract_strided_slice %19 {offsets = [0, 8], sizes = [16, 1], strides = [1, 1]} : vector<16x12xf32> to vector<16x1xf32>
    %104 = vector.broadcast %102 : vector<1x8xf32> to vector<16x8xf32>
    %105 = vector.broadcast %103 : vector<16x1xf32> to vector<16x8xf32>
    %106 = arith.addf %104, %105 : vector<16x8xf32>
    %107 = arith.minimumf %97, %106 : vector<16x8xf32>
    %108 = vector.broadcast %102 : vector<1x8xf32> to vector<16x8xf32>
    %109 = vector.broadcast %103 : vector<16x1xf32> to vector<16x8xf32>
    %110 = arith.subf %108, %109 : vector<16x8xf32>
    %111 = arith.maximumf %101, %110 : vector<16x8xf32>
    %112 = vector.extract_strided_slice %11 {offsets = [9, 0], sizes = [1, 8], strides = [1, 1]} : vector<12x8xf32> to vector<1x8xf32>
    %113 = vector.extract_strided_slice %19 {offsets = [0, 9], sizes = [16, 1], strides = [1, 1]} : vector<16x12xf32> to vector<16x1xf32>
    %114 = vector.broadcast %112 : vector<1x8xf32> to vector<16x8xf32>
    %115 = vector.broadcast %113 : vector<16x1xf32> to vector<16x8xf32>
    %116 = arith.addf %114, %115 : vector<16x8xf32>
    %117 = arith.minimumf %107, %116 : vector<16x8xf32>
    %118 = vector.broadcast %112 : vector<1x8xf32> to vector<16x8xf32>
    %119 = vector.broadcast %113 : vector<16x1xf32> to vector<16x8xf32>
    %120 = arith.subf %118, %119 : vector<16x8xf32>
    %121 = arith.maximumf %111, %120 : vector<16x8xf32>
    %122 = vector.extract_strided_slice %11 {offsets = [10, 0], sizes = [1, 8], strides = [1, 1]} : vector<12x8xf32> to vector<1x8xf32>
    %123 = vector.extract_strided_slice %19 {offsets = [0, 10], sizes = [16, 1], strides = [1, 1]} : vector<16x12xf32> to vector<16x1xf32>
    %124 = vector.broadcast %122 : vector<1x8xf32> to vector<16x8xf32>
    %125 = vector.broadcast %123 : vector<16x1xf32> to vector<16x8xf32>
    %126 = arith.addf %124, %125 : vector<16x8xf32>
    %127 = arith.minimumf %117, %126 : vector<16x8xf32>
    %128 = vector.broadcast %122 : vector<1x8xf32> to vector<16x8xf32>
    %129 = vector.broadcast %123 : vector<16x1xf32> to vector<16x8xf32>
    %130 = arith.subf %128, %129 : vector<16x8xf32>
    %131 = arith.maximumf %121, %130 : vector<16x8xf32>
    %132 = vector.extract_strided_slice %11 {offsets = [11, 0], sizes = [1, 8], strides = [1, 1]} : vector<12x8xf32> to vector<1x8xf32>
    %133 = vector.extract_strided_slice %19 {offsets = [0, 11], sizes = [16, 1], strides = [1, 1]} : vector<16x12xf32> to vector<16x1xf32>
    %134 = vector.broadcast %132 : vector<1x8xf32> to vector<16x8xf32>
    %135 = vector.broadcast %133 : vector<16x1xf32> to vector<16x8xf32>
    %136 = arith.addf %134, %135 : vector<16x8xf32>
    %137 = arith.minimumf %127, %136 : vector<16x8xf32>
    %138 = vector.broadcast %132 : vector<1x8xf32> to vector<16x8xf32>
    %139 = vector.broadcast %133 : vector<16x1xf32> to vector<16x8xf32>
    %140 = arith.subf %138, %139 : vector<16x8xf32>
    %141 = arith.maximumf %131, %140 : vector<16x8xf32>
    %c0_19 = arith.constant 0 : index
    %c0_20 = arith.constant 0 : index
    %142 = vector.load %arg6[%c0_19, %c0_20] : memref<16x4xf32, #tpu.memory_space<vmem>>, vector<16x4xf32>
    %143 = vector.extract_strided_slice %142 {offsets = [0, 0], sizes = [16, 1], strides = [1, 1]} : vector<16x4xf32> to vector<16x1xf32>
    %144 = vector.extract_strided_slice %142 {offsets = [0, 1], sizes = [16, 1], strides = [1, 1]} : vector<16x4xf32> to vector<16x1xf32>
    %145 = vector.extract_strided_slice %142 {offsets = [0, 2], sizes = [16, 1], strides = [1, 1]} : vector<16x4xf32> to vector<16x1xf32>
    %146 = vector.extract_strided_slice %142 {offsets = [0, 3], sizes = [16, 1], strides = [1, 1]} : vector<16x4xf32> to vector<16x1xf32>
    %147 = vector.broadcast %143 : vector<16x1xf32> to vector<16x8xf32>
    %148 = arith.mulf %13, %147 : vector<16x8xf32>
    %149 = vector.broadcast %143 : vector<16x1xf32> to vector<16x8xf32>
    %150 = arith.mulf %15, %149 : vector<16x8xf32>
    %151 = arith.mulf %148, %148 : vector<16x8xf32>
    %152 = arith.subf %150, %151 : vector<16x8xf32>
    %cst_21 = arith.constant 0.000000e+00 : f32
    %153 = vector.broadcast %cst_21 : f32 to vector<16x8xf32>
    %154 = arith.maximumf %152, %153 : vector<16x8xf32>
    %cst_22 = arith.constant 9.99999974E-6 : f32
    %155 = vector.broadcast %cst_22 : f32 to vector<16x8xf32>
    %156 = arith.addf %154, %155 : vector<16x8xf32>
    %157 = math.sqrt %156 : vector<16x8xf32>
    %cst_23 = arith.constant 0.000000e+00 : f32
    %158 = vector.broadcast %cst_23 : f32 to vector<16x1xf32>
    %159 = arith.cmpf ogt, %146, %158 : vector<16x1xf32>
    %cst_24 = arith.constant 0.000000e+00 : f32
    %160 = vector.shape_cast %159 : vector<16x1xi1> to vector<16x1xi1>
    %161 = vector.broadcast %160 : vector<16x1xi1> to vector<16x8xi1>
    %162 = vector.broadcast %cst_24 : f32 to vector<16x8xf32>
    %163 = arith.select %161, %137, %162 : vector<16x8xi1>, vector<16x8xf32>
    %cst_25 = arith.constant 0.000000e+00 : f32
    %164 = vector.broadcast %cst_25 : f32 to vector<16x1xf32>
    %165 = arith.cmpf ogt, %146, %164 : vector<16x1xf32>
    %cst_26 = arith.constant 0.000000e+00 : f32
    %166 = vector.shape_cast %165 : vector<16x1xi1> to vector<16x1xi1>
    %167 = vector.broadcast %166 : vector<16x1xi1> to vector<16x8xi1>
    %168 = vector.broadcast %cst_26 : f32 to vector<16x8xf32>
    %169 = arith.select %167, %141, %168 : vector<16x8xi1>, vector<16x8xf32>
    %170 = tpu.concatenate %0, %148, %163, %169, %157 in 1 : vector<16x8xf32>, vector<16x8xf32>, vector<16x8xf32>, vector<16x8xf32>, vector<16x8xf32> -> vector<16x40xf32>
    %c0_27 = arith.constant 0 : index
    %c0_28 = arith.constant 0 : index
    %171 = vector.load %arg7[%c0_27, %c0_28] : memref<40x384xf32, #tpu.memory_space<vmem>>, vector<40x384xf32>
    %cst_29 = arith.constant dense<0.000000e+00> : vector<16x384xf32>
    %172 = tpu.matmul %170, %171, %cst_29 {dimension_numbers = #tpu.dot_dimension_numbers<[1], [0], [0], [1], [0, 0, 1, 1], [], []>} : vector<16x40xf32>, vector<40x384xf32>, vector<16x384xf32> -> vector<16x384xf32>
    %173 = vector.extract_strided_slice %172 {offsets = [0, 0], sizes = [16, 128], strides = [1, 1]} : vector<16x384xf32> to vector<16x128xf32>
    %174 = vector.extract_strided_slice %172 {offsets = [0, 128], sizes = [16, 128], strides = [1, 1]} : vector<16x384xf32> to vector<16x128xf32>
    %175 = vector.broadcast %144 : vector<16x1xf32> to vector<16x128xf32>
    %176 = arith.mulf %175, %174 : vector<16x128xf32>
    %177 = arith.addf %173, %176 : vector<16x128xf32>
    %178 = vector.extract_strided_slice %172 {offsets = [0, 256], sizes = [16, 128], strides = [1, 1]} : vector<16x384xf32> to vector<16x128xf32>
    %179 = vector.broadcast %145 : vector<16x1xf32> to vector<16x128xf32>
    %180 = arith.mulf %179, %178 : vector<16x128xf32>
    %181 = arith.addf %177, %180 : vector<16x128xf32>
    %c0_30 = arith.constant 0 : index
    %c0_31 = arith.constant 0 : index
    %182 = vector.load %arg12[%c0_30, %c0_31] : memref<4x128xf32, #tpu.memory_space<vmem>>, vector<1x128xf32>
    %183 = vector.broadcast %182 : vector<1x128xf32> to vector<16x128xf32>
    %184 = arith.addf %181, %183 : vector<16x128xf32>
    %cst_32 = arith.constant 0.000000e+00 : f32
    %185 = vector.broadcast %cst_32 : f32 to vector<16x128xf32>
    %186 = arith.maximumf %184, %185 : vector<16x128xf32>
    %cst_33 = arith.constant 0.000000e+00 : f32
    %187 = vector.broadcast %cst_33 : f32 to vector<2x80xf32>
    %188 = vector.extract_strided_slice %186 {offsets = [0, 0], sizes = [2, 128], strides = [1, 1]} : vector<16x128xf32> to vector<2x128xf32>
    %c0_34 = arith.constant 0 : index
    %c0_35 = arith.constant 0 : index
    %189 = vector.load %arg8[%c0_34, %c0_35] : memref<1024x80xf32, #tpu.memory_space<vmem>>, vector<128x80xf32>
    %cst_36 = arith.constant dense<0.000000e+00> : vector<2x80xf32>
    %190 = tpu.matmul %188, %189, %cst_36 {dimension_numbers = #tpu.dot_dimension_numbers<[1], [0], [0], [1], [0, 0, 1, 1], [], []>} : vector<2x128xf32>, vector<128x80xf32>, vector<2x80xf32> -> vector<2x80xf32>
    %191 = arith.addf %187, %190 : vector<2x80xf32>
    %192 = vector.extract_strided_slice %186 {offsets = [2, 0], sizes = [2, 128], strides = [1, 1]} : vector<16x128xf32> to vector<2x128xf32>
    %c128 = arith.constant 128 : index
    %c0_37 = arith.constant 0 : index
    %193 = vector.load %arg8[%c128, %c0_37] : memref<1024x80xf32, #tpu.memory_space<vmem>>, vector<128x80xf32>
    %cst_38 = arith.constant dense<0.000000e+00> : vector<2x80xf32>
    %194 = tpu.matmul %192, %193, %cst_38 {dimension_numbers = #tpu.dot_dimension_numbers<[1], [0], [0], [1], [0, 0, 1, 1], [], []>} : vector<2x128xf32>, vector<128x80xf32>, vector<2x80xf32> -> vector<2x80xf32>
    %195 = arith.addf %191, %194 : vector<2x80xf32>
    %196 = vector.extract_strided_slice %186 {offsets = [4, 0], sizes = [2, 128], strides = [1, 1]} : vector<16x128xf32> to vector<2x128xf32>
    %c256 = arith.constant 256 : index
    %c0_39 = arith.constant 0 : index
    %197 = vector.load %arg8[%c256, %c0_39] : memref<1024x80xf32, #tpu.memory_space<vmem>>, vector<128x80xf32>
    %cst_40 = arith.constant dense<0.000000e+00> : vector<2x80xf32>
    %198 = tpu.matmul %196, %197, %cst_40 {dimension_numbers = #tpu.dot_dimension_numbers<[1], [0], [0], [1], [0, 0, 1, 1], [], []>} : vector<2x128xf32>, vector<128x80xf32>, vector<2x80xf32> -> vector<2x80xf32>
    %199 = arith.addf %195, %198 : vector<2x80xf32>
    %200 = vector.extract_strided_slice %186 {offsets = [6, 0], sizes = [2, 128], strides = [1, 1]} : vector<16x128xf32> to vector<2x128xf32>
    %c384 = arith.constant 384 : index
    %c0_41 = arith.constant 0 : index
    %201 = vector.load %arg8[%c384, %c0_41] : memref<1024x80xf32, #tpu.memory_space<vmem>>, vector<128x80xf32>
    %cst_42 = arith.constant dense<0.000000e+00> : vector<2x80xf32>
    %202 = tpu.matmul %200, %201, %cst_42 {dimension_numbers = #tpu.dot_dimension_numbers<[1], [0], [0], [1], [0, 0, 1, 1], [], []>} : vector<2x128xf32>, vector<128x80xf32>, vector<2x80xf32> -> vector<2x80xf32>
    %203 = arith.addf %199, %202 : vector<2x80xf32>
    %204 = vector.extract_strided_slice %186 {offsets = [8, 0], sizes = [2, 128], strides = [1, 1]} : vector<16x128xf32> to vector<2x128xf32>
    %c512 = arith.constant 512 : index
    %c0_43 = arith.constant 0 : index
    %205 = vector.load %arg8[%c512, %c0_43] : memref<1024x80xf32, #tpu.memory_space<vmem>>, vector<128x80xf32>
    %cst_44 = arith.constant dense<0.000000e+00> : vector<2x80xf32>
    %206 = tpu.matmul %204, %205, %cst_44 {dimension_numbers = #tpu.dot_dimension_numbers<[1], [0], [0], [1], [0, 0, 1, 1], [], []>} : vector<2x128xf32>, vector<128x80xf32>, vector<2x80xf32> -> vector<2x80xf32>
    %207 = arith.addf %203, %206 : vector<2x80xf32>
    %208 = vector.extract_strided_slice %186 {offsets = [10, 0], sizes = [2, 128], strides = [1, 1]} : vector<16x128xf32> to vector<2x128xf32>
    %c640 = arith.constant 640 : index
    %c0_45 = arith.constant 0 : index
    %209 = vector.load %arg8[%c640, %c0_45] : memref<1024x80xf32, #tpu.memory_space<vmem>>, vector<128x80xf32>
    %cst_46 = arith.constant dense<0.000000e+00> : vector<2x80xf32>
    %210 = tpu.matmul %208, %209, %cst_46 {dimension_numbers = #tpu.dot_dimension_numbers<[1], [0], [0], [1], [0, 0, 1, 1], [], []>} : vector<2x128xf32>, vector<128x80xf32>, vector<2x80xf32> -> vector<2x80xf32>
    %211 = arith.addf %207, %210 : vector<2x80xf32>
    %212 = vector.extract_strided_slice %186 {offsets = [12, 0], sizes = [2, 128], strides = [1, 1]} : vector<16x128xf32> to vector<2x128xf32>
    %c768 = arith.constant 768 : index
    %c0_47 = arith.constant 0 : index
    %213 = vector.load %arg8[%c768, %c0_47] : memref<1024x80xf32, #tpu.memory_space<vmem>>, vector<128x80xf32>
    %cst_48 = arith.constant dense<0.000000e+00> : vector<2x80xf32>
    %214 = tpu.matmul %212, %213, %cst_48 {dimension_numbers = #tpu.dot_dimension_numbers<[1], [0], [0], [1], [0, 0, 1, 1], [], []>} : vector<2x128xf32>, vector<128x80xf32>, vector<2x80xf32> -> vector<2x80xf32>
    %215 = arith.addf %211, %214 : vector<2x80xf32>
    %216 = vector.extract_strided_slice %186 {offsets = [14, 0], sizes = [2, 128], strides = [1, 1]} : vector<16x128xf32> to vector<2x128xf32>
    %c896 = arith.constant 896 : index
    %c0_49 = arith.constant 0 : index
    %217 = vector.load %arg8[%c896, %c0_49] : memref<1024x80xf32, #tpu.memory_space<vmem>>, vector<128x80xf32>
    %cst_50 = arith.constant dense<0.000000e+00> : vector<2x80xf32>
    %218 = tpu.matmul %216, %217, %cst_50 {dimension_numbers = #tpu.dot_dimension_numbers<[1], [0], [0], [1], [0, 0, 1, 1], [], []>} : vector<2x128xf32>, vector<128x80xf32>, vector<2x80xf32> -> vector<2x80xf32>
    %219 = arith.addf %215, %218 : vector<2x80xf32>
    %c1 = arith.constant 1 : index
    %c0_51 = arith.constant 0 : index
    %220 = vector.load %arg12[%c1, %c0_51] : memref<4x128xf32, #tpu.memory_space<vmem>>, vector<1x80xf32>
    %221 = vector.broadcast %220 : vector<1x80xf32> to vector<2x80xf32>
    %222 = arith.addf %219, %221 : vector<2x80xf32>
    %223 = vector.extract_strided_slice %222 {offsets = [0, 0], sizes = [2, 16], strides = [1, 1]} : vector<2x80xf32> to vector<2x16xf32>
    %cst_52 = arith.constant 0.000000e+00 : f32
    %224 = vector.broadcast %cst_52 : f32 to vector<2x16xf32>
    %225 = arith.maximumf %223, %224 : vector<2x16xf32>
    %226 = vector.extract_strided_slice %222 {offsets = [0, 16], sizes = [2, 64], strides = [1, 1]} : vector<2x80xf32> to vector<2x64xf32>
    %cst_53 = arith.constant 0.000000e+00 : f32
    %227 = vector.broadcast %cst_53 : f32 to vector<2x64xf32>
    %228 = arith.maximumf %226, %227 : vector<2x64xf32>
    %c0_54 = arith.constant 0 : index
    %c0_55 = arith.constant 0 : index
    %229 = vector.load %arg9[%c0_54, %c0_55] : memref<64x64xf32, #tpu.memory_space<vmem>>, vector<64x64xf32>
    %cst_56 = arith.constant dense<0.000000e+00> : vector<2x64xf32>
    %230 = tpu.matmul %228, %229, %cst_56 {dimension_numbers = #tpu.dot_dimension_numbers<[1], [0], [0], [1], [0, 0, 1, 1], [], []>} : vector<2x64xf32>, vector<64x64xf32>, vector<2x64xf32> -> vector<2x64xf32>
    %c2 = arith.constant 2 : index
    %c0_57 = arith.constant 0 : index
    %231 = vector.load %arg12[%c2, %c0_57] : memref<4x128xf32, #tpu.memory_space<vmem>>, vector<1x64xf32>
    %232 = vector.broadcast %231 : vector<1x64xf32> to vector<2x64xf32>
    %233 = arith.addf %230, %232 : vector<2x64xf32>
    %cst_58 = arith.constant 0.000000e+00 : f32
    %234 = vector.broadcast %cst_58 : f32 to vector<2x64xf32>
    %235 = arith.maximumf %233, %234 : vector<2x64xf32>
    %c0_59 = arith.constant 0 : index
    %c0_60 = arith.constant 0 : index
    %236 = vector.load %arg10[%c0_59, %c0_60] : memref<64x1xf32, #tpu.memory_space<vmem>>, vector<64x1xf32>
    %cst_61 = arith.constant dense<0.000000e+00> : vector<2x1xf32>
    %237 = tpu.matmul %235, %236, %cst_61 {dimension_numbers = #tpu.dot_dimension_numbers<[1], [0], [0], [1], [0, 0, 1, 1], [], []>} : vector<2x64xf32>, vector<64x1xf32>, vector<2x1xf32> -> vector<2x1xf32>
    %c3 = arith.constant 3 : index
    %c0_62 = arith.constant 0 : index
    %238 = vector.load %arg12[%c3, %c0_62] : memref<4x128xf32, #tpu.memory_space<vmem>>, vector<1x1xf32>
    %239 = vector.broadcast %238 : vector<1x1xf32> to vector<2x1xf32>
    %240 = arith.addf %237, %239 : vector<2x1xf32>
    %c0_63 = arith.constant 0 : index
    %c0_64 = arith.constant 0 : index
    %241 = vector.load %arg11[%c0_63, %c0_64] : memref<16x128xf32, #tpu.memory_space<vmem>>, vector<16x128xf32>
    %cst_65 = arith.constant dense<0.000000e+00> : vector<2x128xf32>
    %242 = tpu.matmul %225, %241, %cst_65 {dimension_numbers = #tpu.dot_dimension_numbers<[1], [0], [0], [1], [0, 0, 1, 1], [], []>} : vector<2x16xf32>, vector<16x128xf32>, vector<2x128xf32> -> vector<2x128xf32>
    %243 = vector.broadcast %240 : vector<2x1xf32> to vector<2x128xf32>
    %244 = arith.addf %243, %242 : vector<2x128xf32>
    %c0_66 = arith.constant 0 : index
    %c0_67 = arith.constant 0 : index
    %245 = vector.load %arg13[%c0_66, %c0_67] : memref<2x128xf32, #tpu.memory_space<vmem>>, vector<2x128xf32>
    tpu.vector_store %arg13[%c0_66, %c0_67], %244 {strides = array<i32>} : memref<2x128xf32, #tpu.memory_space<vmem>>, vector<2x128xf32>,
    return
  }
}

</mosaic_0001>

<llo_original>
// kernel: tpu_custom_call.1
$region0: #{tpu_custom_call.1}
  #allocation0 [shape = 'u32[]', space=smem, size = 0x4, offset = 0x4, fixed_abs, tag = 'smem constant byte address 0x4 - core index']
  #allocation1 [shape = 'u32[144,128]{1,0:T(1,128)}', space=vmem, size = 0x12000, scoped, tag = 'internal scratch']
  %s0 = inlined_call_operand.vmem [shape: f32[16,8], index: 0, kind: input, shape index: {}]
  %s1 = inlined_call_operand.vmem [shape: f32[8,16], index: 1, kind: input, shape index: {}]
  %s2 = inlined_call_operand.vmem [shape: f32[12,16], index: 2, kind: input, shape index: {}]
  %s3 = inlined_call_operand.vmem [shape: f32[12,16], index: 3, kind: input, shape index: {}]
  %s4 = inlined_call_operand.vmem [shape: f32[12,8], index: 4, kind: input, shape index: {}]
  %s5 = inlined_call_operand.vmem [shape: f32[16,12], index: 5, kind: input, shape index: {}]
  %s6 = inlined_call_operand.vmem [shape: f32[16,4], index: 6, kind: input, shape index: {}]
  %s7 = inlined_call_operand.vmem [shape: f32[40,384], index: 7, kind: input, shape index: {}]
  %s8 = inlined_call_operand.vmem [shape: f32[1024,80], index: 8, kind: input, shape index: {}]
  %s9 = inlined_call_operand.vmem [shape: f32[64,64], index: 9, kind: input, shape index: {}]
  %s10 = inlined_call_operand.vmem [shape: f32[64,1], index: 10, kind: input, shape index: {}]
  %s11 = inlined_call_operand.vmem [shape: f32[16,128], index: 11, kind: input, shape index: {}]
  %s12 = inlined_call_operand.vmem [shape: f32[4,128], index: 12, kind: input, shape index: {}]
  %s13 = inlined_call_operand.hbm [shape: f32[2,128], index: 13, kind: output, shape index: {}]
  %s14 = sld [smem:[#allocation0]]
  $region62: #{tpu_custom_call.1} parent=0
    _
  %s16 = ssub.s32 1, %s14
  %s17 = scalar_select 0, %s16, %s14
  $region1: #{tpu_custom_call.1} parent=0
    #allocation2 [shape = 'u8[1024]{0}', space=vmem, size = 0x400, scoped, tag = 'output window, operand 0, single buffered']
    #allocation3 [shape = 's32[1]{0}', space=sflag, size = 0x4, scoped, tag = 'scoped memory for tpu_custom_call.1']
    %18 = vsyncpa [#allocation3], 0
    // Predicated region
    $region2: #{tpu_custom_call.1} parent=1 // pred_check
      _
    $region3: #{tpu_custom_call.1} parent=1 // pred_check_branch
      %20 = sbr.rel (0) target = $region5
    $region4: #{tpu_custom_call.1} parent=1 // pred_region
      _
    $region5: #{tpu_custom_call.1} parent=1 // pred_fallthru
      _
    // Predicated region
    $region6: #{tpu_custom_call.1} parent=1 // pred_check
      _
    $region7: #{tpu_custom_call.1} parent=1 // pred_check_branch
      %22 = sbr.rel (0) target = $region9
    $region8: #{tpu_custom_call.1} parent=1 // pred_region
      _
    $region9: #{tpu_custom_call.1} parent=1 // pred_fallthru
      _
    // Predicated region
    $region10: #{tpu_custom_call.1} parent=1 // pred_check
      _
    $region11: #{tpu_custom_call.1} parent=1 // pred_check_branch
      %24 = sbr.rel (0) target = $region13
    $region12: #{tpu_custom_call.1} parent=1 // pred_region
      _
    $region13: #{tpu_custom_call.1} parent=1 // pred_fallthru
      _
    // Predicated region
    $region14: #{tpu_custom_call.1} parent=1 // pred_check
      _
    $region15: #{tpu_custom_call.1} parent=1 // pred_check_branch
      %26 = sbr.rel (0) target = $region17
    $region16: #{tpu_custom_call.1} parent=1 // pred_region
      _
    $region17: #{tpu_custom_call.1} parent=1 // pred_fallthru
      _
    // Predicated region
    $region18: #{tpu_custom_call.1} parent=1 // pred_check
      _
    $region19: #{tpu_custom_call.1} parent=1 // pred_check_branch
      %28 = sbr.rel (0) target = $region21
    $region20: #{tpu_custom_call.1} parent=1 // pred_region
      _
    $region21: #{tpu_custom_call.1} parent=1 // pred_fallthru
      _
    // Predicated region
    $region22: #{tpu_custom_call.1} parent=1 // pred_check
      _
    $region23: #{tpu_custom_call.1} parent=1 // pred_check_branch
      %30 = sbr.rel (0) target = $region25
    $region24: #{tpu_custom_call.1} parent=1 // pred_region
      _
    $region25: #{tpu_custom_call.1} parent=1 // pred_fallthru
      _
    // Predicated region
    $region26: #{tpu_custom_call.1} parent=1 // pred_check
      _
    $region27: #{tpu_custom_call.1} parent=1 // pred_check_branch
      %32 = sbr.rel (0) target = $region29
    $region28: #{tpu_custom_call.1} parent=1 // pred_region
      _
    $region29: #{tpu_custom_call.1} parent=1 // pred_fallthru
      _
    // Predicated region
    $region30: #{tpu_custom_call.1} parent=1 // pred_check
      _
    $region31: #{tpu_custom_call.1} parent=1 // pred_check_branch
      %34 = sbr.rel (0) target = $region33
    $region32: #{tpu_custom_call.1} parent=1 // pred_region
      _
    $region33: #{tpu_custom_call.1} parent=1 // pred_fallthru
      _
    // Predicated region
    $region34: #{tpu_custom_call.1} parent=1 // pred_check
      _
    $region35: #{tpu_custom_call.1} parent=1 // pred_check_branch
      %36 = sbr.rel (0) target = $region37
    $region36: #{tpu_custom_call.1} parent=1 // pred_region
      _
    $region37: #{tpu_custom_call.1} parent=1 // pred_fallthru
      _
    // Predicated region
    $region38: #{tpu_custom_call.1} parent=1 // pred_check
      _
    $region39: #{tpu_custom_call.1} parent=1 // pred_check_branch
      %38 = sbr.rel (0) target = $region41
    $region40: #{tpu_custom_call.1} parent=1 // pred_region
      _
    $region41: #{tpu_custom_call.1} parent=1 // pred_fallthru
      _
    // Predicated region
    $region42: #{tpu_custom_call.1} parent=1 // pred_check
      _
    $region43: #{tpu_custom_call.1} parent=1 // pred_check_branch
      %40 = sbr.rel (0) target = $region45
    $region44: #{tpu_custom_call.1} parent=1 // pred_region
      _
    $region45: #{tpu_custom_call.1} parent=1 // pred_fallthru
      _
    // Predicated region
    $region46: #{tpu_custom_call.1} parent=1 // pred_check
      _
    $region47: #{tpu_custom_call.1} parent=1 // pred_check_branch
      %42 = sbr.rel (0) target = $region49
    $region48: #{tpu_custom_call.1} parent=1 // pred_region
      _
    $region49: #{tpu_custom_call.1} parent=1 // pred_fallthru
      _
    // Predicated region
    $region50: #{tpu_custom_call.1} parent=1 // pred_check
      _
    $region51: #{tpu_custom_call.1} parent=1 // pred_check_branch
      %44 = sbr.rel (0) target = $region53
    $region52: #{tpu_custom_call.1} parent=1 // pred_region
      _
    $region53: #{tpu_custom_call.1} parent=1 // pred_fallthru
      _
    %v45 = vld [vmem:[%s0] sm:$0xff]
    %v46 = vld [vmem:[%s0 + $0x8] sm:$0xff]
    %v47 = vld [vmem:[%s1] sm:$0xff]
    %vm48 = vcmask 64512
    %v50 = vsel %vm48, %v45, 0
    %v53 = vsel %vm48, %v46, 0
    %55 = vmatprep.subr.mxu0 0.0
    %56 = vmatpush1.msra.mxu0 %v47
    %57 = vmatprep.subr.mxu0 0.0
    %58 = vmatpush1.msra.mxu0 0.0
    %59 = vmatprep.subr.mxu0 0.0
    %60 = vmatpush1.msra.mxu0 0.0
    %61 = vmatprep.subr.mxu0 0.0
    %62 = vmatpush1.msra.mxu0 0.0
    %63 = vmatprep.subr.mxu0 0.0
    %64 = vmatpush1.msra.mxu0 0.0
    %65 = vmatprep.subr.mxu0 0.0
    %66 = vmatpush1.msra.mxu0 0.0
    %67 = vmatprep.subr.mxu0 0.0
    %68 = vmatpush1.msra.mxu0 0.0
    %69 = vmatprep.subr.mxu0 0.0
    %70 = vmatpush1.msra.mxu0 0.0
    %71 = vmatprep.subr.mxu0 0.0
    %72 = vmatpush1.msra.mxu0 0.0
    %73 = vmatprep.subr.mxu0 0.0
    %74 = vmatpush1.msra.mxu0 0.0
    %75 = vmatprep.subr.mxu0 0.0
    %76 = vmatpush1.msra.mxu0 0.0
    %77 = vmatprep.subr.mxu0 0.0
    %78 = vmatpush1.msra.mxu0 0.0
    %79 = vmatprep.subr.mxu0 0.0
    %80 = vmatpush1.msra.mxu0 0.0
    %81 = vmatprep.subr.mxu0 0.0
    %82 = vmatpush1.msra.mxu0 0.0
    %83 = vmatprep.subr.mxu0 0.0
    %84 = vmatpush1.msra.mxu0 0.0
    %85 = vmatprep.subr.mxu0 0.0
    %86 = vmatpush1.msra.mxu0 0.0
    %87 = vmatprep.subr.mxu0 0.0
    %88 = vmatpush1.msra.mxu0 0.0
    %89 = vmatprep.subr.mxu0 0.0
    %90 = vmatpush1.msra.mxu0 0.0
    %91 = vmatprep.subr.mxu0 0.0
    %92 = vmatpush1.msra.mxu0 0.0
    %93 = vmatprep.subr.mxu0 0.0
    %94 = vmatpush1.msra.mxu0 0.0
    %95 = vmatprep.subr.mxu0 0.0
    %96 = vmatpush1.msra.mxu0 0.0
    %97 = vmatprep.subr.mxu0 0.0
    %98 = vmatpush1.msra.mxu0 0.0
    %99 = vmatprep.subr.mxu0 0.0
    %100 = vmatpush1.msra.mxu0 0.0
    %101 = vmatprep.subr.mxu0 0.0
    %102 = vmatpush1.msra.mxu0 0.0
    %103 = vmatprep.subr.mxu0 0.0
    %104 = vmatpush1.msra.mxu0 0.0
    %105 = vmatprep.subr.mxu0 0.0
    %106 = vmatpush1.msra.mxu0 0.0
    %107 = vmatprep.subr.mxu0 0.0
    %108 = vmatpush1.msra.mxu0 0.0
    %109 = vmatprep.subr.mxu0 0.0
    %110 = vmatpush1.msra.mxu0 0.0
    %111 = vmatprep.subr.mxu0 0.0
    %112 = vmatpush1.msra.mxu0 0.0
    %113 = vmatprep.subr.mxu0 0.0
    %114 = vmatpush1.msra.mxu0 0.0
    %115 = vmatprep.subr.mxu0 0.0
    %116 = vmatpush1.msra.mxu0 0.0
    %117 = vmatprep.subr.mxu0 0.0
    %118 = vmatpush1.msra.mxu0 0.0
    %119 = vmatprep.mubr.f32.mxu0 0.0
    %120 = vmatmul.mubr.f32.gmra.mrb[0].mxu0 %v50
    %v121 = vpop.f32.mrb[0].mxu0
    %v122 = vadd.f32 0.0, %v121
    %v123 = vpop.f32.mrb[0].mxu0
    %124 = vmatprep.mubr.f32.mxu0 0.0
    %125 = vmatmul.mubr.f32.gmra.mrb[0].mxu0 %v53
    %v126 = vpop.f32.mrb[0].mxu0
    %v127 = vadd.f32 0.0, %v126
    %v128 = vpop.f32.mrb[0].mxu0
    %129 = vdwg.mxu0
    %v130 = vld [vmem:[%s2] sm:$0xff]
    %v131 = vld [vmem:[%s2 + $0x8] sm:$0xf]
    %v132 = vld [vmem:[%s3] sm:$0xff]
    %v133 = vld [vmem:[%s3 + $0x8] sm:$0xf]
    %136 = vrot.lane.b32.xlu0 %v122, 120
    %v137 = vpop.permute.xlu0 %136
    %138 = vrot.lane.b32.xlu0 %v127, 120
    %v139 = vpop.permute.xlu0 %138
    %vm142 = vcmask 130048
    %v144 = vsel %vm142, %v132, 0
    %v147 = vsel %vm142, %v133, 0
    %149 = vmatprep.subr.mxu0 0.0
    %150 = vmatpush1.msra.mxu0 %v137
    %151 = vmatprep.subr.mxu0 0.0
    %152 = vmatpush1.msra.mxu0 %v139
    %153 = vmatprep.subr.mxu0 0.0
    %154 = vmatpush1.msra.mxu0 0.0
    %155 = vmatprep.subr.mxu0 0.0
    %156 = vmatpush1.msra.mxu0 0.0
    %157 = vmatprep.subr.mxu0 0.0
    %158 = vmatpush1.msra.mxu0 0.0
    %159 = vmatprep.subr.mxu0 0.0
    %160 = vmatpush1.msra.mxu0 0.0
    %161 = vmatprep.subr.mxu0 0.0
    %162 = vmatpush1.msra.mxu0 0.0
    %163 = vmatprep.subr.mxu0 0.0
    %164 = vmatpush1.msra.mxu0 0.0
    %165 = vmatprep.subr.mxu0 0.0
    %166 = vmatpush1.msra.mxu0 0.0
    %167 = vmatprep.subr.mxu0 0.0
    %168 = vmatpush1.msra.mxu0 0.0
    %169 = vmatprep.subr.mxu0 0.0
    %170 = vmatpush1.msra.mxu0 0.0
    %171 = vmatprep.subr.mxu0 0.0
    %172 = vmatpush1.msra.mxu0 0.0
    %173 = vmatprep.subr.mxu0 0.0
    %174 = vmatpush1.msra.mxu0 0.0
    %175 = vmatprep.subr.mxu0 0.0
    %176 = vmatpush1.msra.mxu0 0.0
    %177 = vmatprep.subr.mxu0 0.0
    %178 = vmatpush1.msra.mxu0 0.0
    %179 = vmatprep.subr.mxu0 0.0
    %180 = vmatpush1.msra.mxu0 0.0
    %181 = vmatprep.subr.mxu0 0.0
    %182 = vmatpush1.msra.mxu0 0.0
    %183 = vmatprep.subr.mxu0 0.0
    %184 = vmatpush1.msra.mxu0 0.0
    %185 = vmatprep.subr.mxu0 0.0
    %186 = vmatpush1.msra.mxu0 0.0
    %187 = vmatprep.subr.mxu0 0.0
    %188 = vmatpush1.msra.mxu0 0.0
    %189 = vmatprep.subr.mxu0 0.0
    %190 = vmatpush1.msra.mxu0 0.0
    %191 = vmatprep.subr.mxu0 0.0
    %192 = vmatpush1.msra.mxu0 0.0
    %193 = vmatprep.subr.mxu0 0.0
    %194 = vmatpush1.msra.mxu0 0.0
    %195 = vmatprep.subr.mxu0 0.0
    %196 = vmatpush1.msra.mxu0 0.0
    %197 = vmatprep.subr.mxu0 0.0
    %198 = vmatpush1.msra.mxu0 0.0
    %199 = vmatprep.subr.mxu0 0.0
    %200 = vmatpush1.msra.mxu0 0.0
    %201 = vmatprep.subr.mxu0 0.0
    %202 = vmatpush1.msra.mxu0 0.0
    %203 = vmatprep.subr.mxu0 0.0
    %204 = vmatpush1.msra.mxu0 0.0
    %205 = vmatprep.subr.mxu0 0.0
    %206 = vmatpush1.msra.mxu0 0.0
    %207 = vmatprep.subr.mxu0 0.0
    %208 = vmatpush1.msra.mxu0 0.0
    %209 = vmatprep.subr.mxu0 0.0
    %210 = vmatpush1.msra.mxu0 0.0
    %211 = vmatprep.subr.mxu0 0.0
    %212 = vmatpush1.msra.mxu0 0.0
    %213 = vmatprep.mubr.f32.mxu0 0.0
    %214 = vmatmul.mubr.f32.gmra.mrb[0].mxu0 %v144
    %v215 = vpop.f32.mrb[0].mxu0
    %v216 = vadd.f32 0.0, %v215
    %v217 = vpop.f32.mrb[0].mxu0
    %218 = vmatprep.mubr.f32.mxu0 0.0
    %219 = vmatmul.mubr.f32.gmra.mrb[0].mxu0 %v147
    %v220 = vpop.f32.mrb[0].mxu0
    %v221 = vadd.f32 0.0, %v220
    %v222 = vpop.f32.mrb[0].mxu0
    %223 = vdwg.mxu0
    %v225 = vsel %vm142, %v130, 0
    %v228 = vsel %vm142, %v131, 0
    %230 = vmatprep.subr.mxu0 0.0
    %231 = vmatpush1.msra.mxu0 %v122
    %232 = vmatprep.subr.mxu0 0.0
    %233 = vmatpush1.msra.mxu0 %v127
    %234 = vmatprep.subr.mxu0 0.0
    %235 = vmatpush1.msra.mxu0 0.0
    %236 = vmatprep.subr.mxu0 0.0
    %237 = vmatpush1.msra.mxu0 0.0
    %238 = vmatprep.subr.mxu0 0.0
    %239 = vmatpush1.msra.mxu0 0.0
    %240 = vmatprep.subr.mxu0 0.0
    %241 = vmatpush1.msra.mxu0 0.0
    %242 = vmatprep.subr.mxu0 0.0
    %243 = vmatpush1.msra.mxu0 0.0
    %244 = vmatprep.subr.mxu0 0.0
    %245 = vmatpush1.msra.mxu0 0.0
    %246 = vmatprep.subr.mxu0 0.0
    %247 = vmatpush1.msra.mxu0 0.0
    %248 = vmatprep.subr.mxu0 0.0
    %249 = vmatpush1.msra.mxu0 0.0
    %250 = vmatprep.subr.mxu0 0.0
    %251 = vmatpush1.msra.mxu0 0.0
    %252 = vmatprep.subr.mxu0 0.0
    %253 = vmatpush1.msra.mxu0 0.0
    %254 = vmatprep.subr.mxu0 0.0
    %255 = vmatpush1.msra.mxu0 0.0
    %256 = vmatprep.subr.mxu0 0.0
    %257 = vmatpush1.msra.mxu0 0.0
    %258 = vmatprep.subr.mxu0 0.0
    %259 = vmatpush1.msra.mxu0 0.0
    %260 = vmatprep.subr.mxu0 0.0
    %261 = vmatpush1.msra.mxu0 0.0
    %262 = vmatprep.subr.mxu0 0.0
    %263 = vmatpush1.msra.mxu0 0.0
    %264 = vmatprep.subr.mxu0 0.0
    %265 = vmatpush1.msra.mxu0 0.0
    %266 = vmatprep.subr.mxu0 0.0
    %267 = vmatpush1.msra.mxu0 0.0
    %268 = vmatprep.subr.mxu0 0.0
    %269 = vmatpush1.msra.mxu0 0.0
    %270 = vmatprep.subr.mxu0 0.0
    %271 = vmatpush1.msra.mxu0 0.0
    %272 = vmatprep.subr.mxu0 0.0
    %273 = vmatpush1.msra.mxu0 0.0
    %274 = vmatprep.subr.mxu0 0.0
    %275 = vmatpush1.msra.mxu0 0.0
    %276 = vmatprep.subr.mxu0 0.0
    %277 = vmatpush1.msra.mxu0 0.0
    %278 = vmatprep.subr.mxu0 0.0
    %279 = vmatpush1.msra.mxu0 0.0
    %280 = vmatprep.subr.mxu0 0.0
    %281 = vmatpush1.msra.mxu0 0.0
    %282 = vmatprep.subr.mxu0 0.0
    %283 = vmatpush1.msra.mxu0 0.0
    %284 = vmatprep.subr.mxu0 0.0
    %285 = vmatpush1.msra.mxu0 0.0
    %286 = vmatprep.subr.mxu0 0.0
    %287 = vmatpush1.msra.mxu0 0.0
    %288 = vmatprep.subr.mxu0 0.0
    %289 = vmatpush1.msra.mxu0 0.0
    %290 = vmatprep.subr.mxu0 0.0
    %291 = vmatpush1.msra.mxu0 0.0
    %292 = vmatprep.subr.mxu0 0.0
    %293 = vmatpush1.msra.mxu0 0.0
    %294 = vmatprep.mubr.f32.mxu0 0.0
    %295 = vmatmul.mubr.f32.gmra.mrb[0].mxu0 %v225
    %v296 = vpop.f32.mrb[0].mxu0
    %v297 = vadd.f32 %v216, %v296
    %v298 = vpop.f32.mrb[0].mxu0
    %299 = vmatprep.mubr.f32.mxu0 0.0
    %300 = vmatmul.mubr.f32.gmra.mrb[0].mxu0 %v228
    %v301 = vpop.f32.mrb[0].mxu0
    %v302 = vadd.f32 %v221, %v301
    %v303 = vpop.f32.mrb[0].mxu0
    %304 = vdwg.mxu0
    %v305 = vld [vmem:[%s4] sm:$0xff]
    %v306 = vld [vmem:[%s4 + $0x8] sm:$0xf]
    %v307 = vadd.f32 %v297, %v305
    %v308 = vadd.f32 %v302, %v306
    %v309 = vld [vmem:[%s5] sm:$0xff]
    %v310 = vld [vmem:[%s5 + $0x8] sm:$0xff]
    %vm311 = vcmask 97280
    %v313 = vsel %vm311, %v309, 0
    %v316 = vsel %vm311, %v310, 0
    %vm318 = vcmask 1043456
    %v320 = vsel %vm318, %v308, 0
    %322 = vmatprep.subr.mxu0 0.0
    %323 = vmatpush1.msra.mxu0 %v307
    %324 = vmatprep.subr.mxu0 0.0
    %325 = vmatpush1.msra.mxu0 %v320
    %326 = vmatprep.subr.mxu0 0.0
    %327 = vmatpush1.msra.mxu0 0.0
    %328 = vmatprep.subr.mxu0 0.0
    %329 = vmatpush1.msra.mxu0 0.0
    %330 = vmatprep.subr.mxu0 0.0
    %331 = vmatpush1.msra.mxu0 0.0
    %332 = vmatprep.subr.mxu0 0.0
    %333 = vmatpush1.msra.mxu0 0.0
    %334 = vmatprep.subr.mxu0 0.0
    %335 = vmatpush1.msra.mxu0 0.0
    %336 = vmatprep.subr.mxu0 0.0
    %337 = vmatpush1.msra.mxu0 0.0
    %338 = vmatprep.subr.mxu0 0.0
    %339 = vmatpush1.msra.mxu0 0.0
    %340 = vmatprep.subr.mxu0 0.0
    %341 = vmatpush1.msra.mxu0 0.0
    %342 = vmatprep.subr.mxu0 0.0
    %343 = vmatpush1.msra.mxu0 0.0
    %344 = vmatprep.subr.mxu0 0.0
    %345 = vmatpush1.msra.mxu0 0.0
    %346 = vmatprep.subr.mxu0 0.0
    %347 = vmatpush1.msra.mxu0 0.0
    %348 = vmatprep.subr.mxu0 0.0
    %349 = vmatpush1.msra.mxu0 0.0
    %350 = vmatprep.subr.mxu0 0.0
    %351 = vmatpush1.msra.mxu0 0.0
    %352 = vmatprep.subr.mxu0 0.0
    %353 = vmatpush1.msra.mxu0 0.0
    %354 = vmatprep.subr.mxu0 0.0
    %355 = vmatpush1.msra.mxu0 0.0
    %356 = vmatprep.subr.mxu0 0.0
    %357 = vmatpush1.msra.mxu0 0.0
    %358 = vmatprep.subr.mxu0 0.0
    %359 = vmatpush1.msra.mxu0 0.0
    %360 = vmatprep.subr.mxu0 0.0
    %361 = vmatpush1.msra.mxu0 0.0
    %362 = vmatprep.subr.mxu0 0.0
    %363 = vmatpush1.msra.mxu0 0.0
    %364 = vmatprep.subr.mxu0 0.0
    %365 = vmatpush1.msra.mxu0 0.0
    %366 = vmatprep.subr.mxu0 0.0
    %367 = vmatpush1.msra.mxu0 0.0
    %368 = vmatprep.subr.mxu0 0.0
    %369 = vmatpush1.msra.mxu0 0.0
    %370 = vmatprep.subr.mxu0 0.0
    %371 = vmatpush1.msra.mxu0 0.0
    %372 = vmatprep.subr.mxu0 0.0
    %373 = vmatpush1.msra.mxu0 0.0
    %374 = vmatprep.subr.mxu0 0.0
    %375 = vmatpush1.msra.mxu0 0.0
    %376 = vmatprep.subr.mxu0 0.0
    %377 = vmatpush1.msra.mxu0 0.0
    %378 = vmatprep.subr.mxu0 0.0
    %379 = vmatpush1.msra.mxu0 0.0
    %380 = vmatprep.subr.mxu0 0.0
    %381 = vmatpush1.msra.mxu0 0.0
    %382 = vmatprep.subr.mxu0 0.0
    %383 = vmatpush1.msra.mxu0 0.0
    %384 = vmatprep.subr.mxu0 0.0
    %385 = vmatpush1.msra.mxu0 0.0
    %386 = vmatprep.mubr.f32.mxu0 0.0
    %387 = vmatmul.mubr.f32.gmra.mrb[0].mxu0 %v313
    %v388 = vpop.f32.mrb[0].mxu0
    %v389 = vadd.f32 0.0, %v388
    %v390 = vpop.f32.mrb[0].mxu0
    %391 = vmatprep.mubr.f32.mxu0 0.0
    %392 = vmatmul.mubr.f32.gmra.mrb[0].mxu0 %v316
    %v393 = vpop.f32.mrb[0].mxu0
    %v394 = vadd.f32 0.0, %v393
    %v395 = vpop.f32.mrb[0].mxu0
    %396 = vdwg.mxu0
    %v397 = vmul.f32 %v307, %v307
    %v398 = vmul.f32 %v308, %v308
    %v400 = vsel %vm318, %v398, 0
    %402 = vmatprep.subr.mxu0 0.0
    %403 = vmatpush1.msra.mxu0 %v397
    %404 = vmatprep.subr.mxu0 0.0
    %405 = vmatpush1.msra.mxu0 %v400
    %406 = vmatprep.subr.mxu0 0.0
    %407 = vmatpush1.msra.mxu0 0.0
    %408 = vmatprep.subr.mxu0 0.0
    %409 = vmatpush1.msra.mxu0 0.0
    %410 = vmatprep.subr.mxu0 0.0
    %411 = vmatpush1.msra.mxu0 0.0
    %412 = vmatprep.subr.mxu0 0.0
    %413 = vmatpush1.msra.mxu0 0.0
    %414 = vmatprep.subr.mxu0 0.0
    %415 = vmatpush1.msra.mxu0 0.0
    %416 = vmatprep.subr.mxu0 0.0
    %417 = vmatpush1.msra.mxu0 0.0
    %418 = vmatprep.subr.mxu0 0.0
    %419 = vmatpush1.msra.mxu0 0.0
    %420 = vmatprep.subr.mxu0 0.0
    %421 = vmatpush1.msra.mxu0 0.0
    %422 = vmatprep.subr.mxu0 0.0
    %423 = vmatpush1.msra.mxu0 0.0
    %424 = vmatprep.subr.mxu0 0.0
    %425 = vmatpush1.msra.mxu0 0.0
    %426 = vmatprep.subr.mxu0 0.0
    %427 = vmatpush1.msra.mxu0 0.0
    %428 = vmatprep.subr.mxu0 0.0
    %429 = vmatpush1.msra.mxu0 0.0
    %430 = vmatprep.subr.mxu0 0.0
    %431 = vmatpush1.msra.mxu0 0.0
    %432 = vmatprep.subr.mxu0 0.0
    %433 = vmatpush1.msra.mxu0 0.0
    %434 = vmatprep.subr.mxu0 0.0
    %435 = vmatpush1.msra.mxu0 0.0
    %436 = vmatprep.subr.mxu0 0.0
    %437 = vmatpush1.msra.mxu0 0.0
    %438 = vmatprep.subr.mxu0 0.0
    %439 = vmatpush1.msra.mxu0 0.0
    %440 = vmatprep.subr.mxu0 0.0
    %441 = vmatpush1.msra.mxu0 0.0
    %442 = vmatprep.subr.mxu0 0.0
    %443 = vmatpush1.msra.mxu0 0.0
    %444 = vmatprep.subr.mxu0 0.0
    %445 = vmatpush1.msra.mxu0 0.0
    %446 = vmatprep.subr.mxu0 0.0
    %447 = vmatpush1.msra.mxu0 0.0
    %448 = vmatprep.subr.mxu0 0.0
    %449 = vmatpush1.msra.mxu0 0.0
    %450 = vmatprep.subr.mxu0 0.0
    %451 = vmatpush1.msra.mxu0 0.0
    %452 = vmatprep.subr.mxu0 0.0
    %453 = vmatpush1.msra.mxu0 0.0
    %454 = vmatprep.subr.mxu0 0.0
    %455 = vmatpush1.msra.mxu0 0.0
    %456 = vmatprep.subr.mxu0 0.0
    %457 = vmatpush1.msra.mxu0 0.0
    %458 = vmatprep.subr.mxu0 0.0
    %459 = vmatpush1.msra.mxu0 0.0
    %460 = vmatprep.subr.mxu0 0.0
    %461 = vmatpush1.msra.mxu0 0.0
    %462 = vmatprep.subr.mxu0 0.0
    %463 = vmatpush1.msra.mxu0 0.0
    %464 = vmatprep.subr.mxu0 0.0
    %465 = vmatpush1.msra.mxu0 0.0
    %466 = vmatprep.mubr.f32.mxu0 0.0
    %467 = vmatmul.mubr.f32.gmra.mrb[0].mxu0 %v313
    %v468 = vpop.f32.mrb[0].mxu0
    %v469 = vadd.f32 0.0, %v468
    %v470 = vpop.f32.mrb[0].mxu0
    %471 = vmatprep.mubr.f32.mxu0 0.0
    %472 = vmatmul.mubr.f32.gmra.mrb[0].mxu0 %v316
    %v473 = vpop.f32.mrb[0].mxu0
    %v474 = vadd.f32 0.0, %v473
    %v475 = vpop.f32.mrb[0].mxu0
    %476 = vdwg.mxu0
    %v477 = vsub.f32 1.0, %v309
    %v478 = vsub.f32 1.0, %v310
    %v479 = vmul.f32 %v477, 1e+30
    %v480 = vmul.f32 %v478, 1e+30
    %v481 = vlaneseq
    %v482 = vshrl.u32 %v481, 7
    %v483 = vsub.s32 0, %v482
    %v484 = vrot.slane %v307, %v483
    %486 = vset.pattern.permute.xlu0 0
    %487 = vperm.xlu0 %486, %v479
    %v488 = vpop.permute.xlu0 %487
    %491 = vset.pattern.permute.xlu0 0
    %492 = vperm.xlu0 %491, %v480
    %v493 = vpop.permute.xlu0 %492
    %v495 = vadd.f32 %v484, %v488
    %v496 = vadd.f32 %v484, %v493
    %v497 = vmin.f32 %v495, 1e+30
    %v498 = vmin.f32 %v496, 1e+30
    %v499 = vsub.f32 %v484, %v488
    %v500 = vsub.f32 %v484, %v493
    %v501 = vmax.f32 %v499, -1e+30
    %v502 = vmax.f32 %v500, -1e+30
    %v503 = vlaneseq
    %v504 = vshrl.u32 %v503, 7
    %v505 = vsub.s32 1, %v504
    %v506 = vrot.slane %v307, %v505
    %507 = vset.pattern.permute.xlu0 1
    %508 = vperm.xlu0 %507, %v479
    %v509 = vpop.permute.xlu0 %508
    %511 = vset.pattern.permute.xlu0 1
    %512 = vperm.xlu0 %511, %v480
    %v513 = vpop.permute.xlu0 %512
    %v515 = vadd.f32 %v506, %v509
    %v516 = vadd.f32 %v506, %v513
    %v517 = vmin.f32 %v497, %v515
    %v518 = vmin.f32 %v498, %v516
    %v519 = vsub.f32 %v506, %v509
    %v520 = vsub.f32 %v506, %v513
    %v521 = vmax.f32 %v501, %v519
    %v522 = vmax.f32 %v502, %v520
    %v523 = vlaneseq
    %v524 = vshrl.u32 %v523, 7
    %v525 = vsub.s32 2, %v524
    %v526 = vrot.slane %v307, %v525
    %527 = vset.pattern.permute.xlu0 2
    %528 = vperm.xlu0 %527, %v479
    %v529 = vpop.permute.xlu0 %528
    %531 = vset.pattern.permute.xlu0 2
    %532 = vperm.xlu0 %531, %v480
    %v533 = vpop.permute.xlu0 %532
    %v535 = vadd.f32 %v526, %v529
    %v536 = vadd.f32 %v526, %v533
    %v537 = vmin.f32 %v517, %v535
    %v538 = vmin.f32 %v518, %v536
    %v539 = vsub.f32 %v526, %v529
    %v540 = vsub.f32 %v526, %v533
    %v541 = vmax.f32 %v521, %v539
    %v542 = vmax.f32 %v522, %v540
    %v543 = vlaneseq
    %v544 = vshrl.u32 %v543, 7
    %v545 = vsub.s32 3, %v544
    %v546 = vrot.slane %v307, %v545
    %547 = vset.pattern.permute.xlu0 3
    %548 = vperm.xlu0 %547, %v479
    %v549 = vpop.permute.xlu0 %548
    %551 = vset.pattern.permute.xlu0 3
    %552 = vperm.xlu0 %551, %v480
    %v553 = vpop.permute.xlu0 %552
    %v555 = vadd.f32 %v546, %v549
    %v556 = vadd.f32 %v546, %v553
    %v557 = vmin.f32 %v537, %v555
    %v558 = vmin.f32 %v538, %v556
    %v559 = vsub.f32 %v546, %v549
    %v560 = vsub.f32 %v546, %v553
    %v561 = vmax.f32 %v541, %v559
    %v562 = vmax.f32 %v542, %v560
    %v563 = vlaneseq
    %v564 = vshrl.u32 %v563, 7
    %v565 = vsub.s32 4, %v564
    %v566 = vrot.slane %v307, %v565
    %567 = vset.pattern.permute.xlu0 4
    %568 = vperm.xlu0 %567, %v479
    %v569 = vpop.permute.xlu0 %568
    %571 = vset.pattern.permute.xlu0 4
    %572 = vperm.xlu0 %571, %v480
    %v573 = vpop.permute.xlu0 %572
    %v575 = vadd.f32 %v566, %v569
    %v576 = vadd.f32 %v566, %v573
    %v577 = vmin.f32 %v557, %v575
    %v578 = vmin.f32 %v558, %v576
    %v579 = vsub.f32 %v566, %v569
    %v580 = vsub.f32 %v566, %v573
    %v581 = vmax.f32 %v561, %v579
    %v582 = vmax.f32 %v562, %v580
    %v583 = vlaneseq
    %v584 = vshrl.u32 %v583, 7
    %v585 = vsub.s32 5, %v584
    %v586 = vrot.slane %v307, %v585
    %587 = vset.pattern.permute.xlu0 5
    %588 = vperm.xlu0 %587, %v479
    %v589 = vpop.permute.xlu0 %588
    %591 = vset.pattern.permute.xlu0 5
    %592 = vperm.xlu0 %591, %v480
    %v593 = vpop.permute.xlu0 %592
    %v595 = vadd.f32 %v586, %v589
    %v596 = vadd.f32 %v586, %v593
    %v597 = vmin.f32 %v577, %v595
    %v598 = vmin.f32 %v578, %v596
    %v599 = vsub.f32 %v586, %v589
    %v600 = vsub.f32 %v586, %v593
    %v601 = vmax.f32 %v581, %v599
    %v602 = vmax.f32 %v582, %v600
    %v603 = vlaneseq
    %v604 = vshrl.u32 %v603, 7
    %v605 = vsub.s32 6, %v604
    %v606 = vrot.slane %v307, %v605
    %607 = vset.pattern.permute.xlu0 6
    %608 = vperm.xlu0 %607, %v479
    %v609 = vpop.permute.xlu0 %608
    %611 = vset.pattern.permute.xlu0 6
    %612 = vperm.xlu0 %611, %v480
    %v613 = vpop.permute.xlu0 %612
    %v615 = vadd.f32 %v606, %v609
    %v616 = vadd.f32 %v606, %v613
    %v617 = vmin.f32 %v597, %v615
    %v618 = vmin.f32 %v598, %v616
    %v619 = vsub.f32 %v606, %v609
    %v620 = vsub.f32 %v606, %v613
    %v621 = vmax.f32 %v601, %v619
    %v622 = vmax.f32 %v602, %v620
    %v623 = vlaneseq
    %v624 = vshrl.u32 %v623, 7
    %v625 = vsub.s32 7, %v624
    %v626 = vrot.slane %v307, %v625
    %627 = vset.pattern.permute.xlu0 7
    %628 = vperm.xlu0 %627, %v479
    %v629 = vpop.permute.xlu0 %628
    %631 = vset.pattern.permute.xlu0 7
    %632 = vperm.xlu0 %631, %v480
    %v633 = vpop.permute.xlu0 %632
    %v635 = vadd.f32 %v626, %v629
    %v636 = vadd.f32 %v626, %v633
    %v637 = vmin.f32 %v617, %v635
    %v638 = vmin.f32 %v618, %v636
    %v639 = vsub.f32 %v626, %v629
    %v640 = vsub.f32 %v626, %v633
    %v641 = vmax.f32 %v621, %v639
    %v642 = vmax.f32 %v622, %v640
    %v643 = vlaneseq
    %v644 = vshrl.u32 %v643, 7
    %v645 = vsub.s32 0, %v644
    %v646 = vrot.slane %v308, %v645
    %647 = vset.pattern.permute.xlu0 8
    %648 = vperm.xlu0 %647, %v479
    %v649 = vpop.permute.xlu0 %648
    %651 = vset.pattern.permute.xlu0 8
    %652 = vperm.xlu0 %651, %v480
    %v653 = vpop.permute.xlu0 %652
    %v655 = vadd.f32 %v646, %v649
    %v656 = vadd.f32 %v646, %v653
    %v657 = vmin.f32 %v637, %v655
    %v658 = vmin.f32 %v638, %v656
    %v659 = vsub.f32 %v646, %v649
    %v660 = vsub.f32 %v646, %v653
    %v661 = vmax.f32 %v641, %v659
    %v662 = vmax.f32 %v642, %v660
    %v663 = vlaneseq
    %v664 = vshrl.u32 %v663, 7
    %v665 = vsub.s32 1, %v664
    %v666 = vrot.slane %v308, %v665
    %667 = vset.pattern.permute.xlu0 9
    %668 = vperm.xlu0 %667, %v479
    %v669 = vpop.permute.xlu0 %668
    %671 = vset.pattern.permute.xlu0 9
    %672 = vperm.xlu0 %671, %v480
    %v673 = vpop.permute.xlu0 %672
    %v675 = vadd.f32 %v666, %v669
    %v676 = vadd.f32 %v666, %v673
    %v677 = vmin.f32 %v657, %v675
    %v678 = vmin.f32 %v658, %v676
    %v679 = vsub.f32 %v666, %v669
    %v680 = vsub.f32 %v666, %v673
    %v681 = vmax.f32 %v661, %v679
    %v682 = vmax.f32 %v662, %v680
    %v683 = vlaneseq
    %v684 = vshrl.u32 %v683, 7
    %v685 = vsub.s32 2, %v684
    %v686 = vrot.slane %v308, %v685
    %687 = vset.pattern.permute.xlu0 10
    %688 = vperm.xlu0 %687, %v479
    %v689 = vpop.permute.xlu0 %688
    %691 = vset.pattern.permute.xlu0 10
    %692 = vperm.xlu0 %691, %v480
    %v693 = vpop.permute.xlu0 %692
    %v695 = vadd.f32 %v686, %v689
    %v696 = vadd.f32 %v686, %v693
    %v697 = vmin.f32 %v677, %v695
    %v698 = vmin.f32 %v678, %v696
    %v699 = vsub.f32 %v686, %v689
    %v700 = vsub.f32 %v686, %v693
    %v701 = vmax.f32 %v681, %v699
    %v702 = vmax.f32 %v682, %v700
    %v703 = vlaneseq
    %v704 = vshrl.u32 %v703, 7
    %v705 = vsub.s32 3, %v704
    %v706 = vrot.slane %v308, %v705
    %707 = vset.pattern.permute.xlu0 11
    %708 = vperm.xlu0 %707, %v479
    %v709 = vpop.permute.xlu0 %708
    %711 = vset.pattern.permute.xlu0 11
    %712 = vperm.xlu0 %711, %v480
    %v713 = vpop.permute.xlu0 %712
    %v715 = vadd.f32 %v706, %v709
    %v716 = vadd.f32 %v706, %v713
    %v717 = vmin.f32 %v697, %v715
    %v718 = vmin.f32 %v698, %v716
    %v719 = vsub.f32 %v706, %v709
    %v720 = vsub.f32 %v706, %v713
    %v721 = vmax.f32 %v701, %v719
    %v722 = vmax.f32 %v702, %v720
    %v723 = vld [vmem:[%s6] sm:$0xff]
    %v724 = vld [vmem:[%s6 + $0x8] sm:$0xff]
    %726 = vset.pattern.permute.xlu0 0
    %727 = vperm.xlu0 %726, %v723
    %v728 = vpop.permute.xlu0 %727
    %731 = vset.pattern.permute.xlu0 0
    %732 = vperm.xlu0 %731, %v724
    %v733 = vpop.permute.xlu0 %732
    %v735 = vmul.f32 %v389, %v728
    %v736 = vmul.f32 %v394, %v733
    %v737 = vmul.f32 %v469, %v728
    %v738 = vmul.f32 %v474, %v733
    %v739 = vmul.f32 %v735, %v735
    %v740 = vmul.f32 %v736, %v736
    %v741 = vsub.f32 %v737, %v739
    %v742 = vsub.f32 %v738, %v740
    %v743 = vmax.f32 %v741, 0.0
    %v744 = vmax.f32 %v742, 0.0
    %v745 = vadd.f32 %v743, 1e-05
    %v746 = vadd.f32 %v744, 1e-05
    %v747 = vrsqrt.pop %v745
    %v748 = vmul.f32 %v745, %v747
    %vm749 = vcmp.eq.f32.partialorder %v745, inf
    %v750 = vsel %vm749, %v745, %v748
    %vm751 = vcmp.eq.f32.partialorder %v745, 0.0
    %v752 = vand.u32 %v745, 2147483648
    %v753 = vsel %vm751, %v752, %v750
    %v754 = vrsqrt.pop %v746
    %v755 = vmul.f32 %v746, %v754
    %vm756 = vcmp.eq.f32.partialorder %v746, inf
    %v757 = vsel %vm756, %v746, %v755
    %vm758 = vcmp.eq.f32.partialorder %v746, 0.0
    %v759 = vand.u32 %v746, 2147483648
    %v760 = vsel %vm758, %v759, %v757
    %vm761 = vcmp.gt.f32.partialorder %v723, 0.0
    %vm762 = vcmp.gt.f32.partialorder %v724, 0.0
    %v763 = vsel %vm761, 1, 0
    %v764 = vsel %vm762, 1, 0
    %765 = vset.pattern.permute.xlu0 3
    %766 = vperm.xlu0 %765, %v763
    %v767 = vpop.permute.xlu0 %766
    %768 = vset.pattern.permute.xlu0 3
    %769 = vperm.xlu0 %768, %v764
    %v770 = vpop.permute.xlu0 %769
    %vm771 = vcmp.eq.s32.totalorder %v767, 1
    %vm772 = vcmp.eq.s32.totalorder %v770, 1
    %v773 = vsel %vm771, %v717, 0.0
    %v774 = vsel %vm772, %v718, 0.0
    %v775 = vsel %vm771, %v721, 0.0
    %v776 = vsel %vm772, %v722, 0.0
    %779 = vrot.lane.b32.xlu0 %v735, 8
    %v780 = vpop.permute.xlu0 %779
    %781 = vrot.lane.b32.xlu0 %v736, 8
    %v782 = vpop.permute.xlu0 %781
    %787 = vrot.lane.b32.xlu0 %v773, 16
    %v788 = vpop.permute.xlu0 %787
    %789 = vrot.lane.b32.xlu0 %v774, 16
    %v790 = vpop.permute.xlu0 %789
    %795 = vrot.lane.b32.xlu0 %v775, 24
    %v796 = vpop.permute.xlu0 %795
    %797 = vrot.lane.b32.xlu0 %v776, 24
    %v798 = vpop.permute.xlu0 %797
    %803 = vrot.lane.b32.xlu0 %v753, 32
    %v804 = vpop.permute.xlu0 %803
    %805 = vrot.lane.b32.xlu0 %v760, 32
    %v806 = vpop.permute.xlu0 %805
    %v809 = vsel %vm48, %v45, %v780
    %v810 = vsel %vm48, %v46, %v782
    %v811 = vsel %vm142, %v809, %v788
    %v812 = vsel %vm142, %v810, %v790
    %vm813 = vcmask 195584
    %v814 = vsel %vm813, %v811, %v796
    %v815 = vsel %vm813, %v812, %v798
    %vm816 = vcmask 261120
    %v817 = vsel %vm816, %v814, %v804
    %v818 = vsel %vm816, %v815, %v806
    %v819 = vld [vmem:[%s7] sm:$0xff]
    %v820 = vld [vmem:[%s7 + $0x8] sm:$0xff]
    %v821 = vld [vmem:[%s7 + $0x10] sm:$0xff]
    %v822 = vld [vmem:[%s7 + $0x18] sm:$0xff]
    %v823 = vld [vmem:[%s7 + $0x20] sm:$0xff]
    %v824 = vld [vmem:[%s7 + $0x28] sm:$0xff]
    %v825 = vld [vmem:[%s7 + $0x30] sm:$0xff]
    %v826 = vld [vmem:[%s7 + $0x38] sm:$0xff]
    %v827 = vld [vmem:[%s7 + $0x40] sm:$0xff]
    %v828 = vld [vmem:[%s7 + $0x48] sm:$0xff]
    %v829 = vld [vmem:[%s7 + $0x50] sm:$0xff]
    %v830 = vld [vmem:[%s7 + $0x58] sm:$0xff]
    %v831 = vld [vmem:[%s7 + $0x60] sm:$0xff]
    %v832 = vld [vmem:[%s7 + $0x68] sm:$0xff]
    %v833 = vld [vmem:[%s7 + $0x70] sm:$0xff]
    %vm834 = vcmask 326656
    %v836 = vsel %vm834, %v817, 0
    %v839 = vsel %vm834, %v818, 0
    %841 = vmatprep.subr.mxu0 %v820
    %842 = vmatpush1.msra.mxu0 %v819
    %843 = vmatprep.subr.mxu0 %v823
    %844 = vmatpush1.msra.mxu0 %v822
    %845 = vmatprep.subr.mxu0 %v826
    %846 = vmatpush1.msra.mxu0 %v825
    %847 = vmatprep.subr.mxu0 %v829
    %848 = vmatpush1.msra.mxu0 %v828
    %849 = vmatprep.subr.mxu0 %v832
    %850 = vmatpush1.msra.mxu0 %v831
    %851 = vmatprep.subr.mxu0 0.0
    %852 = vmatpush1.msra.mxu0 0.0
    %853 = vmatprep.subr.mxu0 0.0
    %854 = vmatpush1.msra.mxu0 0.0
    %855 = vmatprep.subr.mxu0 0.0
    %856 = vmatpush1.msra.mxu0 0.0
    %857 = vmatprep.subr.mxu0 0.0
    %858 = vmatpush1.msra.mxu0 0.0
    %859 = vmatprep.subr.mxu0 0.0
    %860 = vmatpush1.msra.mxu0 0.0
    %861 = vmatprep.subr.mxu0 0.0
    %862 = vmatpush1.msra.mxu0 0.0
    %863 = vmatprep.subr.mxu0 0.0
    %864 = vmatpush1.msra.mxu0 0.0
    %865 = vmatprep.subr.mxu0 0.0
    %866 = vmatpush1.msra.mxu0 0.0
    %867 = vmatprep.subr.mxu0 0.0
    %868 = vmatpush1.msra.mxu0 0.0
    %869 = vmatprep.subr.mxu0 0.0
    %870 = vmatpush1.msra.mxu0 0.0
    %871 = vmatprep.subr.mxu0 0.0
    %872 = vmatpush1.msra.mxu0 0.0
    %873 = vmatprep.subr.mxu0 0.0
    %874 = vmatpush1.msra.mxu0 0.0
    %875 = vmatprep.subr.mxu0 0.0
    %876 = vmatpush1.msra.mxu0 0.0
    %877 = vmatprep.subr.mxu0 0.0
    %878 = vmatpush1.msra.mxu0 0.0
    %879 = vmatprep.subr.mxu0 0.0
    %880 = vmatpush1.msra.mxu0 0.0
    %881 = vmatprep.subr.mxu0 0.0
    %882 = vmatpush1.msra.mxu0 0.0
    %883 = vmatprep.subr.mxu0 0.0
    %884 = vmatpush1.msra.mxu0 0.0
    %885 = vmatprep.subr.mxu0 0.0
    %886 = vmatpush1.msra.mxu0 0.0
    %887 = vmatprep.subr.mxu0 0.0
    %888 = vmatpush1.msra.mxu0 0.0
    %889 = vmatprep.subr.mxu0 0.0
    %890 = vmatpush1.msra.mxu0 0.0
    %891 = vmatprep.subr.mxu0 0.0
    %892 = vmatpush1.msra.mxu0 0.0
    %893 = vmatprep.subr.mxu0 0.0
    %894 = vmatpush1.msra.mxu0 0.0
    %895 = vmatprep.subr.mxu0 0.0
    %896 = vmatpush1.msra.mxu0 0.0
    %897 = vmatprep.subr.mxu0 0.0
    %898 = vmatpush1.msra.mxu0 0.0
    %899 = vmatprep.subr.mxu0 0.0
    %900 = vmatpush1.msra.mxu0 0.0
    %901 = vmatprep.subr.mxu0 0.0
    %902 = vmatpush1.msra.mxu0 0.0
    %903 = vmatprep.subr.mxu0 0.0
    %904 = vmatpush1.msra.mxu0 0.0
    %905 = vmatprep.mubr.f32.mxu0 0.0
    %906 = vmatmul.mubr.f32.gmra.mrb[0].mxu0 %v836
    %v907 = vpop.f32.mrb[0].mxu0
    %v908 = vadd.f32 0.0, %v907
    %v909 = vpop.f32.mrb[0].mxu0
    %v910 = vadd.f32 0.0, %v909
    %911 = vmatprep.mubr.f32.mxu0 0.0
    %912 = vmatmul.mubr.f32.gmra.mrb[0].mxu0 %v839
    %v913 = vpop.f32.mrb[0].mxu0
    %v914 = vadd.f32 0.0, %v913
    %v915 = vpop.f32.mrb[0].mxu0
    %v916 = vadd.f32 0.0, %v915
    %917 = vdwg.mxu0
    %918 = vmatprep.subr.mxu0 0.0
    %919 = vmatpush1.msra.mxu0 %v821
    %920 = vmatprep.subr.mxu0 0.0
    %921 = vmatpush1.msra.mxu0 %v824
    %922 = vmatprep.subr.mxu0 0.0
    %923 = vmatpush1.msra.mxu0 %v827
    %924 = vmatprep.subr.mxu0 0.0
    %925 = vmatpush1.msra.mxu0 %v830
    %926 = vmatprep.subr.mxu0 0.0
    %927 = vmatpush1.msra.mxu0 %v833
    %928 = vmatprep.subr.mxu0 0.0
    %929 = vmatpush1.msra.mxu0 0.0
    %930 = vmatprep.subr.mxu0 0.0
    %931 = vmatpush1.msra.mxu0 0.0
    %932 = vmatprep.subr.mxu0 0.0
    %933 = vmatpush1.msra.mxu0 0.0
    %934 = vmatprep.subr.mxu0 0.0
    %935 = vmatpush1.msra.mxu0 0.0
    %936 = vmatprep.subr.mxu0 0.0
    %937 = vmatpush1.msra.mxu0 0.0
    %938 = vmatprep.subr.mxu0 0.0
    %939 = vmatpush1.msra.mxu0 0.0
    %940 = vmatprep.subr.mxu0 0.0
    %941 = vmatpush1.msra.mxu0 0.0
    %942 = vmatprep.subr.mxu0 0.0
    %943 = vmatpush1.msra.mxu0 0.0
    %944 = vmatprep.subr.mxu0 0.0
    %945 = vmatpush1.msra.mxu0 0.0
    %946 = vmatprep.subr.mxu0 0.0
    %947 = vmatpush1.msra.mxu0 0.0
    %948 = vmatprep.subr.mxu0 0.0
    %949 = vmatpush1.msra.mxu0 0.0
    %950 = vmatprep.subr.mxu0 0.0
    %951 = vmatpush1.msra.mxu0 0.0
    %952 = vmatprep.subr.mxu0 0.0
    %953 = vmatpush1.msra.mxu0 0.0
    %954 = vmatprep.subr.mxu0 0.0
    %955 = vmatpush1.msra.mxu0 0.0
    %956 = vmatprep.subr.mxu0 0.0
    %957 = vmatpush1.msra.mxu0 0.0
    %958 = vmatprep.subr.mxu0 0.0
    %959 = vmatpush1.msra.mxu0 0.0
    %960 = vmatprep.subr.mxu0 0.0
    %961 = vmatpush1.msra.mxu0 0.0
    %962 = vmatprep.subr.mxu0 0.0
    %963 = vmatpush1.msra.mxu0 0.0
    %964 = vmatprep.subr.mxu0 0.0
    %965 = vmatpush1.msra.mxu0 0.0
    %966 = vmatprep.subr.mxu0 0.0
    %967 = vmatpush1.msra.mxu0 0.0
    %968 = vmatprep.subr.mxu0 0.0
    %969 = vmatpush1.msra.mxu0 0.0
    %970 = vmatprep.subr.mxu0 0.0
    %971 = vmatpush1.msra.mxu0 0.0
    %972 = vmatprep.subr.mxu0 0.0
    %973 = vmatpush1.msra.mxu0 0.0
    %974 = vmatprep.subr.mxu0 0.0
    %975 = vmatpush1.msra.mxu0 0.0
    %976 = vmatprep.subr.mxu0 0.0
    %977 = vmatpush1.msra.mxu0 0.0
    %978 = vmatprep.subr.mxu0 0.0
    %979 = vmatpush1.msra.mxu0 0.0
    %980 = vmatprep.subr.mxu0 0.0
    %981 = vmatpush1.msra.mxu0 0.0
    %982 = vmatprep.mubr.f32.mxu0 0.0
    %983 = vmatmul.mubr.f32.gmra.mrb[0].mxu0 %v836
    %v984 = vpop.f32.mrb[0].mxu0
    %v985 = vadd.f32 0.0, %v984
    %v986 = vpop.f32.mrb[0].mxu0
    %987 = vmatprep.mubr.f32.mxu0 0.0
    %988 = vmatmul.mubr.f32.gmra.mrb[0].mxu0 %v839
    %v989 = vpop.f32.mrb[0].mxu0
    %v990 = vadd.f32 0.0, %v989
    %v991 = vpop.f32.mrb[0].mxu0
    %992 = vdwg.mxu0
    %993 = vset.pattern.permute.xlu0 1
    %994 = vperm.xlu0 %993, %v723
    %v995 = vpop.permute.xlu0 %994
    %997 = vset.pattern.permute.xlu0 1
    %998 = vperm.xlu0 %997, %v724
    %v999 = vpop.permute.xlu0 %998
    %v1001 = vmul.f32 %v995, %v910
    %v1002 = vmul.f32 %v999, %v916
    %v1003 = vadd.f32 %v908, %v1001
    %v1004 = vadd.f32 %v914, %v1002
    %1005 = vset.pattern.permute.xlu0 2
    %1006 = vperm.xlu0 %1005, %v723
    %v1007 = vpop.permute.xlu0 %1006
    %1009 = vset.pattern.permute.xlu0 2
    %1010 = vperm.xlu0 %1009, %v724
    %v1011 = vpop.permute.xlu0 %1010
    %v1013 = vmul.f32 %v1007, %v985
    %v1014 = vmul.f32 %v1011, %v990
    %v1015 = vadd.f32 %v1003, %v1013
    %v1016 = vadd.f32 %v1004, %v1014
    %v1017 = vld [vmem:[%s12] sm:$0x1]
    %v1018 = vlaneseq
    %v1019 = vshrl.u32 %v1018, 7
    %v1020 = vsub.s32 0, %v1019
    %v1021 = vrot.slane %v1017, %v1020
    %v1022 = vadd.f32 %v1015, %v1021
    %v1023 = vadd.f32 %v1016, %v1021
    %v1024 = vmax.f32 %v1022, 0.0
    %v1025 = vmax.f32 %v1023, 0.0
    %v1026 = vld [vmem:[%s8] sm:$0xff]
    %v1027 = vld [vmem:[%s8 + $0x8] sm:$0xff]
    %v1028 = vld [vmem:[%s8 + $0x10] sm:$0xff]
    %v1029 = vld [vmem:[%s8 + $0x18] sm:$0xff]
    %v1030 = vld [vmem:[%s8 + $0x20] sm:$0xff]
    %v1031 = vld [vmem:[%s8 + $0x28] sm:$0xff]
    %v1032 = vld [vmem:[%s8 + $0x30] sm:$0xff]
    %v1033 = vld [vmem:[%s8 + $0x38] sm:$0xff]
    %v1034 = vld [vmem:[%s8 + $0x40] sm:$0xff]
    %v1035 = vld [vmem:[%s8 + $0x48] sm:$0xff]
    %v1036 = vld [vmem:[%s8 + $0x50] sm:$0xff]
    %v1037 = vld [vmem:[%s8 + $0x58] sm:$0xff]
    %v1038 = vld [vmem:[%s8 + $0x60] sm:$0xff]
    %v1039 = vld [vmem:[%s8 + $0x68] sm:$0xff]
    %v1040 = vld [vmem:[%s8 + $0x70] sm:$0xff]
    %v1041 = vld [vmem:[%s8 + $0x78] sm:$0xff]
    %v1042 = vld [vmem:[%s8 + $0x80] sm:$0xff]
    %v1043 = vld [vmem:[%s8 + $0x88] sm:$0xff]
    %v1044 = vld [vmem:[%s8 + $0x90] sm:$0xff]
    %v1045 = vld [vmem:[%s8 + $0x98] sm:$0xff]
    %v1046 = vld [vmem:[%s8 + $0xa0] sm:$0xff]
    %v1047 = vld [vmem:[%s8 + $0xa8] sm:$0xff]
    %v1048 = vld [vmem:[%s8 + $0xb0] sm:$0xff]
    %v1049 = vld [vmem:[%s8 + $0xb8] sm:$0xff]
    %v1050 = vld [vmem:[%s8 + $0xc0] sm:$0xff]
    %v1051 = vld [vmem:[%s8 + $0xc8] sm:$0xff]
    %v1052 = vld [vmem:[%s8 + $0xd0] sm:$0xff]
    %v1053 = vld [vmem:[%s8 + $0xd8] sm:$0xff]
    %v1054 = vld [vmem:[%s8 + $0xe0] sm:$0xff]
    %v1055 = vld [vmem:[%s8 + $0xe8] sm:$0xff]
    %v1056 = vld [vmem:[%s8 + $0xf0] sm:$0xff]
    %v1057 = vld [vmem:[%s8 + $0xf8] sm:$0xff]
    %v1059 = vrot.slane %v1024, 2
    %1061 = vmatprep.subr.mxu0 0.0
    %1062 = vmatpush1.msra.mxu0 %v1042
    %1063 = vmatprep.subr.mxu0 0.0
    %1064 = vmatpush1.msra.mxu0 %v1043
    %1065 = vmatprep.subr.mxu0 0.0
    %1066 = vmatpush1.msra.mxu0 %v1044
    %1067 = vmatprep.subr.mxu0 0.0
    %1068 = vmatpush1.msra.mxu0 %v1045
    %1069 = vmatprep.subr.mxu0 0.0
    %1070 = vmatpush1.msra.mxu0 %v1046
    %1071 = vmatprep.subr.mxu0 0.0
    %1072 = vmatpush1.msra.mxu0 %v1047
    %1073 = vmatprep.subr.mxu0 0.0
    %1074 = vmatpush1.msra.mxu0 %v1048
    %1075 = vmatprep.subr.mxu0 0.0
    %1076 = vmatpush1.msra.mxu0 %v1049
    %1077 = vmatprep.subr.mxu0 0.0
    %1078 = vmatpush1.msra.mxu0 %v1050
    %1079 = vmatprep.subr.mxu0 0.0
    %1080 = vmatpush1.msra.mxu0 %v1051
    %1081 = vmatprep.subr.mxu0 0.0
    %1082 = vmatpush1.msra.mxu0 %v1052
    %1083 = vmatprep.subr.mxu0 0.0
    %1084 = vmatpush1.msra.mxu0 %v1053
    %1085 = vmatprep.subr.mxu0 0.0
    %1086 = vmatpush1.msra.mxu0 %v1054
    %1087 = vmatprep.subr.mxu0 0.0
    %1088 = vmatpush1.msra.mxu0 %v1055
    %1089 = vmatprep.subr.mxu0 0.0
    %1090 = vmatpush1.msra.mxu0 %v1056
    %1091 = vmatprep.subr.mxu0 0.0
    %1092 = vmatpush1.msra.mxu0 %v1057
    %1093 = vmatprep.subr.mxu0 0.0
    %1094 = vmatpush1.msra.mxu0 0.0
    %1095 = vmatprep.subr.mxu0 0.0
    %1096 = vmatpush1.msra.mxu0 0.0
    %1097 = vmatprep.subr.mxu0 0.0
    %1098 = vmatpush1.msra.mxu0 0.0
    %1099 = vmatprep.subr.mxu0 0.0
    %1100 = vmatpush1.msra.mxu0 0.0
    %1101 = vmatprep.subr.mxu0 0.0
    %1102 = vmatpush1.msra.mxu0 0.0
    %1103 = vmatprep.subr.mxu0 0.0
    %1104 = vmatpush1.msra.mxu0 0.0
    %1105 = vmatprep.subr.mxu0 0.0
    %1106 = vmatpush1.msra.mxu0 0.0
    %1107 = vmatprep.subr.mxu0 0.0
    %1108 = vmatpush1.msra.mxu0 0.0
    %1109 = vmatprep.subr.mxu0 0.0
    %1110 = vmatpush1.msra.mxu0 0.0
    %1111 = vmatprep.subr.mxu0 0.0
    %1112 = vmatpush1.msra.mxu0 0.0
    %1113 = vmatprep.subr.mxu0 0.0
    %1114 = vmatpush1.msra.mxu0 0.0
    %1115 = vmatprep.subr.mxu0 0.0
    %1116 = vmatpush1.msra.mxu0 0.0
    %1117 = vmatprep.subr.mxu0 0.0
    %1118 = vmatpush1.msra.mxu0 0.0
    %1119 = vmatprep.subr.mxu0 0.0
    %1120 = vmatpush1.msra.mxu0 0.0
    %1121 = vmatprep.subr.mxu0 0.0
    %1122 = vmatpush1.msra.mxu0 0.0
    %1123 = vmatprep.subr.mxu0 0.0
    %1124 = vmatpush1.msra.mxu0 0.0
    %1125 = vmatprep.mubr.f32.mxu0 0.0
    %1126 = vmatmul.mubr.f32.gmra.mrb[0].mxu0 %v1059
    %v1127 = vpop.f32.mrb[0].mxu0
    %v1128 = vadd.f32 0.0, %v1127
    %v1129 = vpop.f32.mrb[0].mxu0
    %1130 = vdwg.mxu0
    %1131 = vmatprep.subr.mxu0 0.0
    %1132 = vmatpush1.msra.mxu0 %v1026
    %1133 = vmatprep.subr.mxu0 0.0
    %1134 = vmatpush1.msra.mxu0 %v1027
    %1135 = vmatprep.subr.mxu0 0.0
    %1136 = vmatpush1.msra.mxu0 %v1028
    %1137 = vmatprep.subr.mxu0 0.0
    %1138 = vmatpush1.msra.mxu0 %v1029
    %1139 = vmatprep.subr.mxu0 0.0
    %1140 = vmatpush1.msra.mxu0 %v1030
    %1141 = vmatprep.subr.mxu0 0.0
    %1142 = vmatpush1.msra.mxu0 %v1031
    %1143 = vmatprep.subr.mxu0 0.0
    %1144 = vmatpush1.msra.mxu0 %v1032
    %1145 = vmatprep.subr.mxu0 0.0
    %1146 = vmatpush1.msra.mxu0 %v1033
    %1147 = vmatprep.subr.mxu0 0.0
    %1148 = vmatpush1.msra.mxu0 %v1034
    %1149 = vmatprep.subr.mxu0 0.0
    %1150 = vmatpush1.msra.mxu0 %v1035
    %1151 = vmatprep.subr.mxu0 0.0
    %1152 = vmatpush1.msra.mxu0 %v1036
    %1153 = vmatprep.subr.mxu0 0.0
    %1154 = vmatpush1.msra.mxu0 %v1037
    %1155 = vmatprep.subr.mxu0 0.0
    %1156 = vmatpush1.msra.mxu0 %v1038
    %1157 = vmatprep.subr.mxu0 0.0
    %1158 = vmatpush1.msra.mxu0 %v1039
    %1159 = vmatprep.subr.mxu0 0.0
    %1160 = vmatpush1.msra.mxu0 %v1040
    %1161 = vmatprep.subr.mxu0 0.0
    %1162 = vmatpush1.msra.mxu0 %v1041
    %1163 = vmatprep.subr.mxu0 0.0
    %1164 = vmatpush1.msra.mxu0 0.0
    %1165 = vmatprep.subr.mxu0 0.0
    %1166 = vmatpush1.msra.mxu0 0.0
    %1167 = vmatprep.subr.mxu0 0.0
    %1168 = vmatpush1.msra.mxu0 0.0
    %1169 = vmatprep.subr.mxu0 0.0
    %1170 = vmatpush1.msra.mxu0 0.0
    %1171 = vmatprep.subr.mxu0 0.0
    %1172 = vmatpush1.msra.mxu0 0.0
    %1173 = vmatprep.subr.mxu0 0.0
    %1174 = vmatpush1.msra.mxu0 0.0
    %1175 = vmatprep.subr.mxu0 0.0
    %1176 = vmatpush1.msra.mxu0 0.0
    %1177 = vmatprep.subr.mxu0 0.0
    %1178 = vmatpush1.msra.mxu0 0.0
    %1179 = vmatprep.subr.mxu0 0.0
    %1180 = vmatpush1.msra.mxu0 0.0
    %1181 = vmatprep.subr.mxu0 0.0
    %1182 = vmatpush1.msra.mxu0 0.0
    %1183 = vmatprep.subr.mxu0 0.0
    %1184 = vmatpush1.msra.mxu0 0.0
    %1185 = vmatprep.subr.mxu0 0.0
    %1186 = vmatpush1.msra.mxu0 0.0
    %1187 = vmatprep.subr.mxu0 0.0
    %1188 = vmatpush1.msra.mxu0 0.0
    %1189 = vmatprep.subr.mxu0 0.0
    %1190 = vmatpush1.msra.mxu0 0.0
    %1191 = vmatprep.subr.mxu0 0.0
    %1192 = vmatpush1.msra.mxu0 0.0
    %1193 = vmatprep.subr.mxu0 0.0
    %1194 = vmatpush1.msra.mxu0 0.0
    %1195 = vmatprep.mubr.f32.mxu0 0.0
    %1196 = vmatmul.mubr.f32.gmra.mrb[0].mxu0 %v1024
    %v1197 = vpop.f32.mrb[0].mxu0
    %v1198 = vadd.f32 %v1128, %v1197
    %v1199 = vpop.f32.mrb[0].mxu0
    %1200 = vdwg.mxu0
    %v1201 = vld [vmem:[%s8 + $0x100] sm:$0xff]
    %v1202 = vld [vmem:[%s8 + $0x108] sm:$0xff]
    %v1203 = vld [vmem:[%s8 + $0x110] sm:$0xff]
    %v1204 = vld [vmem:[%s8 + $0x118] sm:$0xff]
    %v1205 = vld [vmem:[%s8 + $0x120] sm:$0xff]
    %v1206 = vld [vmem:[%s8 + $0x128] sm:$0xff]
    %v1207 = vld [vmem:[%s8 + $0x130] sm:$0xff]
    %v1208 = vld [vmem:[%s8 + $0x138] sm:$0xff]
    %v1209 = vld [vmem:[%s8 + $0x140] sm:$0xff]
    %v1210 = vld [vmem:[%s8 + $0x148] sm:$0xff]
    %v1211 = vld [vmem:[%s8 + $0x150] sm:$0xff]
    %v1212 = vld [vmem:[%s8 + $0x158] sm:$0xff]
    %v1213 = vld [vmem:[%s8 + $0x160] sm:$0xff]
    %v1214 = vld [vmem:[%s8 + $0x168] sm:$0xff]
    %v1215 = vld [vmem:[%s8 + $0x170] sm:$0xff]
    %v1216 = vld [vmem:[%s8 + $0x178] sm:$0xff]
    %v1217 = vrot.slane %v1024, 4
    %1219 = vmatprep.subr.mxu0 0.0
    %1220 = vmatpush1.msra.mxu0 %v1201
    %1221 = vmatprep.subr.mxu0 0.0
    %1222 = vmatpush1.msra.mxu0 %v1202
    %1223 = vmatprep.subr.mxu0 0.0
    %1224 = vmatpush1.msra.mxu0 %v1203
    %1225 = vmatprep.subr.mxu0 0.0
    %1226 = vmatpush1.msra.mxu0 %v1204
    %1227 = vmatprep.subr.mxu0 0.0
    %1228 = vmatpush1.msra.mxu0 %v1205
    %1229 = vmatprep.subr.mxu0 0.0
    %1230 = vmatpush1.msra.mxu0 %v1206
    %1231 = vmatprep.subr.mxu0 0.0
    %1232 = vmatpush1.msra.mxu0 %v1207
    %1233 = vmatprep.subr.mxu0 0.0
    %1234 = vmatpush1.msra.mxu0 %v1208
    %1235 = vmatprep.subr.mxu0 0.0
    %1236 = vmatpush1.msra.mxu0 %v1209
    %1237 = vmatprep.subr.mxu0 0.0
    %1238 = vmatpush1.msra.mxu0 %v1210
    %1239 = vmatprep.subr.mxu0 0.0
    %1240 = vmatpush1.msra.mxu0 %v1211
    %1241 = vmatprep.subr.mxu0 0.0
    %1242 = vmatpush1.msra.mxu0 %v1212
    %1243 = vmatprep.subr.mxu0 0.0
    %1244 = vmatpush1.msra.mxu0 %v1213
    %1245 = vmatprep.subr.mxu0 0.0
    %1246 = vmatpush1.msra.mxu0 %v1214
    %1247 = vmatprep.subr.mxu0 0.0
    %1248 = vmatpush1.msra.mxu0 %v1215
    %1249 = vmatprep.subr.mxu0 0.0
    %1250 = vmatpush1.msra.mxu0 %v1216
    %1251 = vmatprep.subr.mxu0 0.0
    %1252 = vmatpush1.msra.mxu0 0.0
    %1253 = vmatprep.subr.mxu0 0.0
    %1254 = vmatpush1.msra.mxu0 0.0
    %1255 = vmatprep.subr.mxu0 0.0
    %1256 = vmatpush1.msra.mxu0 0.0
    %1257 = vmatprep.subr.mxu0 0.0
    %1258 = vmatpush1.msra.mxu0 0.0
    %1259 = vmatprep.subr.mxu0 0.0
    %1260 = vmatpush1.msra.mxu0 0.0
    %1261 = vmatprep.subr.mxu0 0.0
    %1262 = vmatpush1.msra.mxu0 0.0
    %1263 = vmatprep.subr.mxu0 0.0
    %1264 = vmatpush1.msra.mxu0 0.0
    %1265 = vmatprep.subr.mxu0 0.0
    %1266 = vmatpush1.msra.mxu0 0.0
    %1267 = vmatprep.subr.mxu0 0.0
    %1268 = vmatpush1.msra.mxu0 0.0
    %1269 = vmatprep.subr.mxu0 0.0
    %1270 = vmatpush1.msra.mxu0 0.0
    %1271 = vmatprep.subr.mxu0 0.0
    %1272 = vmatpush1.msra.mxu0 0.0
    %1273 = vmatprep.subr.mxu0 0.0
    %1274 = vmatpush1.msra.mxu0 0.0
    %1275 = vmatprep.subr.mxu0 0.0
    %1276 = vmatpush1.msra.mxu0 0.0
    %1277 = vmatprep.subr.mxu0 0.0
    %1278 = vmatpush1.msra.mxu0 0.0
    %1279 = vmatprep.subr.mxu0 0.0
    %1280 = vmatpush1.msra.mxu0 0.0
    %1281 = vmatprep.subr.mxu0 0.0
    %1282 = vmatpush1.msra.mxu0 0.0
    %1283 = vmatprep.mubr.f32.mxu0 0.0
    %1284 = vmatmul.mubr.f32.gmra.mrb[0].mxu0 %v1217
    %v1285 = vpop.f32.mrb[0].mxu0
    %v1286 = vadd.f32 0.0, %v1285
    %v1287 = vpop.f32.mrb[0].mxu0
    %1288 = vdwg.mxu0
    %v1289 = vadd.f32 %v1198, %v1286
    %v1290 = vld [vmem:[%s8 + $0x180] sm:$0xff]
    %v1291 = vld [vmem:[%s8 + $0x188] sm:$0xff]
    %v1292 = vld [vmem:[%s8 + $0x190] sm:$0xff]
    %v1293 = vld [vmem:[%s8 + $0x198] sm:$0xff]
    %v1294 = vld [vmem:[%s8 + $0x1a0] sm:$0xff]
    %v1295 = vld [vmem:[%s8 + $0x1a8] sm:$0xff]
    %v1296 = vld [vmem:[%s8 + $0x1b0] sm:$0xff]
    %v1297 = vld [vmem:[%s8 + $0x1b8] sm:$0xff]
    %v1298 = vld [vmem:[%s8 + $0x1c0] sm:$0xff]
    %v1299 = vld [vmem:[%s8 + $0x1c8] sm:$0xff]
    %v1300 = vld [vmem:[%s8 + $0x1d0] sm:$0xff]
    %v1301 = vld [vmem:[%s8 + $0x1d8] sm:$0xff]
    %v1302 = vld [vmem:[%s8 + $0x1e0] sm:$0xff]
    %v1303 = vld [vmem:[%s8 + $0x1e8] sm:$0xff]
    %v1304 = vld [vmem:[%s8 + $0x1f0] sm:$0xff]
    %v1305 = vld [vmem:[%s8 + $0x1f8] sm:$0xff]
    %v1306 = vrot.slane %v1024, 6
    %1308 = vmatprep.subr.mxu0 0.0
    %1309 = vmatpush1.msra.mxu0 %v1290
    %1310 = vmatprep.subr.mxu0 0.0
    %1311 = vmatpush1.msra.mxu0 %v1291
    %1312 = vmatprep.subr.mxu0 0.0
    %1313 = vmatpush1.msra.mxu0 %v1292
    %1314 = vmatprep.subr.mxu0 0.0
    %1315 = vmatpush1.msra.mxu0 %v1293
    %1316 = vmatprep.subr.mxu0 0.0
    %1317 = vmatpush1.msra.mxu0 %v1294
    %1318 = vmatprep.subr.mxu0 0.0
    %1319 = vmatpush1.msra.mxu0 %v1295
    %1320 = vmatprep.subr.mxu0 0.0
    %1321 = vmatpush1.msra.mxu0 %v1296
    %1322 = vmatprep.subr.mxu0 0.0
    %1323 = vmatpush1.msra.mxu0 %v1297
    %1324 = vmatprep.subr.mxu0 0.0
    %1325 = vmatpush1.msra.mxu0 %v1298
    %1326 = vmatprep.subr.mxu0 0.0
    %1327 = vmatpush1.msra.mxu0 %v1299
    %1328 = vmatprep.subr.mxu0 0.0
    %1329 = vmatpush1.msra.mxu0 %v1300
    %1330 = vmatprep.subr.mxu0 0.0
    %1331 = vmatpush1.msra.mxu0 %v1301
    %1332 = vmatprep.subr.mxu0 0.0
    %1333 = vmatpush1.msra.mxu0 %v1302
    %1334 = vmatprep.subr.mxu0 0.0
    %1335 = vmatpush1.msra.mxu0 %v1303
    %1336 = vmatprep.subr.mxu0 0.0
    %1337 = vmatpush1.msra.mxu0 %v1304
    %1338 = vmatprep.subr.mxu0 0.0
    %1339 = vmatpush1.msra.mxu0 %v1305
    %1340 = vmatprep.subr.mxu0 0.0
    %1341 = vmatpush1.msra.mxu0 0.0
    %1342 = vmatprep.subr.mxu0 0.0
    %1343 = vmatpush1.msra.mxu0 0.0
    %1344 = vmatprep.subr.mxu0 0.0
    %1345 = vmatpush1.msra.mxu0 0.0
    %1346 = vmatprep.subr.mxu0 0.0
    %1347 = vmatpush1.msra.mxu0 0.0
    %1348 = vmatprep.subr.mxu0 0.0
    %1349 = vmatpush1.msra.mxu0 0.0
    %1350 = vmatprep.subr.mxu0 0.0
    %1351 = vmatpush1.msra.mxu0 0.0
    %1352 = vmatprep.subr.mxu0 0.0
    %1353 = vmatpush1.msra.mxu0 0.0
    %1354 = vmatprep.subr.mxu0 0.0
    %1355 = vmatpush1.msra.mxu0 0.0
    %1356 = vmatprep.subr.mxu0 0.0
    %1357 = vmatpush1.msra.mxu0 0.0
    %1358 = vmatprep.subr.mxu0 0.0
    %1359 = vmatpush1.msra.mxu0 0.0
    %1360 = vmatprep.subr.mxu0 0.0
    %1361 = vmatpush1.msra.mxu0 0.0
    %1362 = vmatprep.subr.mxu0 0.0
    %1363 = vmatpush1.msra.mxu0 0.0
    %1364 = vmatprep.subr.mxu0 0.0
    %1365 = vmatpush1.msra.mxu0 0.0
    %1366 = vmatprep.subr.mxu0 0.0
    %1367 = vmatpush1.msra.mxu0 0.0
    %1368 = vmatprep.subr.mxu0 0.0
    %1369 = vmatpush1.msra.mxu0 0.0
    %1370 = vmatprep.subr.mxu0 0.0
    %1371 = vmatpush1.msra.mxu0 0.0
    %1372 = vmatprep.mubr.f32.mxu0 0.0
    %1373 = vmatmul.mubr.f32.gmra.mrb[0].mxu0 %v1306
    %v1374 = vpop.f32.mrb[0].mxu0
    %v1375 = vadd.f32 0.0, %v1374
    %v1376 = vpop.f32.mrb[0].mxu0
    %1377 = vdwg.mxu0
    %v1378 = vadd.f32 %v1289, %v1375
    %v1379 = vld [vmem:[%s8 + $0x200] sm:$0xff]
    %v1380 = vld [vmem:[%s8 + $0x208] sm:$0xff]
    %v1381 = vld [vmem:[%s8 + $0x210] sm:$0xff]
    %v1382 = vld [vmem:[%s8 + $0x218] sm:$0xff]
    %v1383 = vld [vmem:[%s8 + $0x220] sm:$0xff]
    %v1384 = vld [vmem:[%s8 + $0x228] sm:$0xff]
    %v1385 = vld [vmem:[%s8 + $0x230] sm:$0xff]
    %v1386 = vld [vmem:[%s8 + $0x238] sm:$0xff]
    %v1387 = vld [vmem:[%s8 + $0x240] sm:$0xff]
    %v1388 = vld [vmem:[%s8 + $0x248] sm:$0xff]
    %v1389 = vld [vmem:[%s8 + $0x250] sm:$0xff]
    %v1390 = vld [vmem:[%s8 + $0x258] sm:$0xff]
    %v1391 = vld [vmem:[%s8 + $0x260] sm:$0xff]
    %v1392 = vld [vmem:[%s8 + $0x268] sm:$0xff]
    %v1393 = vld [vmem:[%s8 + $0x270] sm:$0xff]
    %v1394 = vld [vmem:[%s8 + $0x278] sm:$0xff]
    %1395 = vmatprep.subr.mxu0 0.0
    %1396 = vmatpush1.msra.mxu0 %v1379
    %1397 = vmatprep.subr.mxu0 0.0
    %1398 = vmatpush1.msra.mxu0 %v1380
    %1399 = vmatprep.subr.mxu0 0.0
    %1400 = vmatpush1.msra.mxu0 %v1381
    %1401 = vmatprep.subr.mxu0 0.0
    %1402 = vmatpush1.msra.mxu0 %v1382
    %1403 = vmatprep.subr.mxu0 0.0
    %1404 = vmatpush1.msra.mxu0 %v1383
    %1405 = vmatprep.subr.mxu0 0.0
    %1406 = vmatpush1.msra.mxu0 %v1384
    %1407 = vmatprep.subr.mxu0 0.0
    %1408 = vmatpush1.msra.mxu0 %v1385
    %1409 = vmatprep.subr.mxu0 0.0
    %1410 = vmatpush1.msra.mxu0 %v1386
    %1411 = vmatprep.subr.mxu0 0.0
    %1412 = vmatpush1.msra.mxu0 %v1387
    %1413 = vmatprep.subr.mxu0 0.0
    %1414 = vmatpush1.msra.mxu0 %v1388
    %1415 = vmatprep.subr.mxu0 0.0
    %1416 = vmatpush1.msra.mxu0 %v1389
    %1417 = vmatprep.subr.mxu0 0.0
    %1418 = vmatpush1.msra.mxu0 %v1390
    %1419 = vmatprep.subr.mxu0 0.0
    %1420 = vmatpush1.msra.mxu0 %v1391
    %1421 = vmatprep.subr.mxu0 0.0
    %1422 = vmatpush1.msra.mxu0 %v1392
    %1423 = vmatprep.subr.mxu0 0.0
    %1424 = vmatpush1.msra.mxu0 %v1393
    %1425 = vmatprep.subr.mxu0 0.0
    %1426 = vmatpush1.msra.mxu0 %v1394
    %1427 = vmatprep.subr.mxu0 0.0
    %1428 = vmatpush1.msra.mxu0 0.0
    %1429 = vmatprep.subr.mxu0 0.0
    %1430 = vmatpush1.msra.mxu0 0.0
    %1431 = vmatprep.subr.mxu0 0.0
    %1432 = vmatpush1.msra.mxu0 0.0
    %1433 = vmatprep.subr.mxu0 0.0
    %1434 = vmatpush1.msra.mxu0 0.0
    %1435 = vmatprep.subr.mxu0 0.0
    %1436 = vmatpush1.msra.mxu0 0.0
    %1437 = vmatprep.subr.mxu0 0.0
    %1438 = vmatpush1.msra.mxu0 0.0
    %1439 = vmatprep.subr.mxu0 0.0
    %1440 = vmatpush1.msra.mxu0 0.0
    %1441 = vmatprep.subr.mxu0 0.0
    %1442 = vmatpush1.msra.mxu0 0.0
    %1443 = vmatprep.subr.mxu0 0.0
    %1444 = vmatpush1.msra.mxu0 0.0
    %1445 = vmatprep.subr.mxu0 0.0
    %1446 = vmatpush1.msra.mxu0 0.0
    %1447 = vmatprep.subr.mxu0 0.0
    %1448 = vmatpush1.msra.mxu0 0.0
    %1449 = vmatprep.subr.mxu0 0.0
    %1450 = vmatpush1.msra.mxu0 0.0
    %1451 = vmatprep.subr.mxu0 0.0
    %1452 = vmatpush1.msra.mxu0 0.0
    %1453 = vmatprep.subr.mxu0 0.0
    %1454 = vmatpush1.msra.mxu0 0.0
    %1455 = vmatprep.subr.mxu0 0.0
    %1456 = vmatpush1.msra.mxu0 0.0
    %1457 = vmatprep.subr.mxu0 0.0
    %1458 = vmatpush1.msra.mxu0 0.0
    %1459 = vmatprep.mubr.f32.mxu0 0.0
    %1460 = vmatmul.mubr.f32.gmra.mrb[0].mxu0 %v1025
    %v1461 = vpop.f32.mrb[0].mxu0
    %v1462 = vadd.f32 0.0, %v1461
    %v1463 = vpop.f32.mrb[0].mxu0
    %1464 = vdwg.mxu0
    %v1465 = vadd.f32 %v1378, %v1462
    %v1466 = vld [vmem:[%s8 + $0x280] sm:$0xff]
    %v1467 = vld [vmem:[%s8 + $0x288] sm:$0xff]
    %v1468 = vld [vmem:[%s8 + $0x290] sm:$0xff]
    %v1469 = vld [vmem:[%s8 + $0x298] sm:$0xff]
    %v1470 = vld [vmem:[%s8 + $0x2a0] sm:$0xff]
    %v1471 = vld [vmem:[%s8 + $0x2a8] sm:$0xff]
    %v1472 = vld [vmem:[%s8 + $0x2b0] sm:$0xff]
    %v1473 = vld [vmem:[%s8 + $0x2b8] sm:$0xff]
    %v1474 = vld [vmem:[%s8 + $0x2c0] sm:$0xff]
    %v1475 = vld [vmem:[%s8 + $0x2c8] sm:$0xff]
    %v1476 = vld [vmem:[%s8 + $0x2d0] sm:$0xff]
    %v1477 = vld [vmem:[%s8 + $0x2d8] sm:$0xff]
    %v1478 = vld [vmem:[%s8 + $0x2e0] sm:$0xff]
    %v1479 = vld [vmem:[%s8 + $0x2e8] sm:$0xff]
    %v1480 = vld [vmem:[%s8 + $0x2f0] sm:$0xff]
    %v1481 = vld [vmem:[%s8 + $0x2f8] sm:$0xff]
    %v1483 = vrot.slane %v1025, 2
    %1485 = vmatprep.subr.mxu0 0.0
    %1486 = vmatpush1.msra.mxu0 %v1466
    %1487 = vmatprep.subr.mxu0 0.0
    %1488 = vmatpush1.msra.mxu0 %v1467
    %1489 = vmatprep.subr.mxu0 0.0
    %1490 = vmatpush1.msra.mxu0 %v1468
    %1491 = vmatprep.subr.mxu0 0.0
    %1492 = vmatpush1.msra.mxu0 %v1469
    %1493 = vmatprep.subr.mxu0 0.0
    %1494 = vmatpush1.msra.mxu0 %v1470
    %1495 = vmatprep.subr.mxu0 0.0
    %1496 = vmatpush1.msra.mxu0 %v1471
    %1497 = vmatprep.subr.mxu0 0.0
    %1498 = vmatpush1.msra.mxu0 %v1472
    %1499 = vmatprep.subr.mxu0 0.0
    %1500 = vmatpush1.msra.mxu0 %v1473
    %1501 = vmatprep.subr.mxu0 0.0
    %1502 = vmatpush1.msra.mxu0 %v1474
    %1503 = vmatprep.subr.mxu0 0.0
    %1504 = vmatpush1.msra.mxu0 %v1475
    %1505 = vmatprep.subr.mxu0 0.0
    %1506 = vmatpush1.msra.mxu0 %v1476
    %1507 = vmatprep.subr.mxu0 0.0
    %1508 = vmatpush1.msra.mxu0 %v1477
    %1509 = vmatprep.subr.mxu0 0.0
    %1510 = vmatpush1.msra.mxu0 %v1478
    %1511 = vmatprep.subr.mxu0 0.0
    %1512 = vmatpush1.msra.mxu0 %v1479
    %1513 = vmatprep.subr.mxu0 0.0
    %1514 = vmatpush1.msra.mxu0 %v1480
    %1515 = vmatprep.subr.mxu0 0.0
    %1516 = vmatpush1.msra.mxu0 %v1481
    %1517 = vmatprep.subr.mxu0 0.0
    %1518 = vmatpush1.msra.mxu0 0.0
    %1519 = vmatprep.subr.mxu0 0.0
    %1520 = vmatpush1.msra.mxu0 0.0
    %1521 = vmatprep.subr.mxu0 0.0
    %1522 = vmatpush1.msra.mxu0 0.0
    %1523 = vmatprep.subr.mxu0 0.0
    %1524 = vmatpush1.msra.mxu0 0.0
    %1525 = vmatprep.subr.mxu0 0.0
    %1526 = vmatpush1.msra.mxu0 0.0
    %1527 = vmatprep.subr.mxu0 0.0
    %1528 = vmatpush1.msra.mxu0 0.0
    %1529 = vmatprep.subr.mxu0 0.0
    %1530 = vmatpush1.msra.mxu0 0.0
    %1531 = vmatprep.subr.mxu0 0.0
    %1532 = vmatpush1.msra.mxu0 0.0
    %1533 = vmatprep.subr.mxu0 0.0
    %1534 = vmatpush1.msra.mxu0 0.0
    %1535 = vmatprep.subr.mxu0 0.0
    %1536 = vmatpush1.msra.mxu0 0.0
    %1537 = vmatprep.subr.mxu0 0.0
    %1538 = vmatpush1.msra.mxu0 0.0
    %1539 = vmatprep.subr.mxu0 0.0
    %1540 = vmatpush1.msra.mxu0 0.0
    %1541 = vmatprep.subr.mxu0 0.0
    %1542 = vmatpush1.msra.mxu0 0.0
    %1543 = vmatprep.subr.mxu0 0.0
    %1544 = vmatpush1.msra.mxu0 0.0
    %1545 = vmatprep.subr.mxu0 0.0
    %1546 = vmatpush1.msra.mxu0 0.0
    %1547 = vmatprep.subr.mxu0 0.0
    %1548 = vmatpush1.msra.mxu0 0.0
    %1549 = vmatprep.mubr.f32.mxu0 0.0
    %1550 = vmatmul.mubr.f32.gmra.mrb[0].mxu0 %v1483
    %v1551 = vpop.f32.mrb[0].mxu0
    %v1552 = vadd.f32 0.0, %v1551
    %v1553 = vpop.f32.mrb[0].mxu0
    %1554 = vdwg.mxu0
    %v1555 = vadd.f32 %v1465, %v1552
    %v1556 = vld [vmem:[%s8 + $0x300] sm:$0xff]
    %v1557 = vld [vmem:[%s8 + $0x308] sm:$0xff]
    %v1558 = vld [vmem:[%s8 + $0x310] sm:$0xff]
    %v1559 = vld [vmem:[%s8 + $0x318] sm:$0xff]
    %v1560 = vld [vmem:[%s8 + $0x320] sm:$0xff]
    %v1561 = vld [vmem:[%s8 + $0x328] sm:$0xff]
    %v1562 = vld [vmem:[%s8 + $0x330] sm:$0xff]
    %v1563 = vld [vmem:[%s8 + $0x338] sm:$0xff]
    %v1564 = vld [vmem:[%s8 + $0x340] sm:$0xff]
    %v1565 = vld [vmem:[%s8 + $0x348] sm:$0xff]
    %v1566 = vld [vmem:[%s8 + $0x350] sm:$0xff]
    %v1567 = vld [vmem:[%s8 + $0x358] sm:$0xff]
    %v1568 = vld [vmem:[%s8 + $0x360] sm:$0xff]
    %v1569 = vld [vmem:[%s8 + $0x368] sm:$0xff]
    %v1570 = vld [vmem:[%s8 + $0x370] sm:$0xff]
    %v1571 = vld [vmem:[%s8 + $0x378] sm:$0xff]
    %v1572 = vrot.slane %v1025, 4
    %1574 = vmatprep.subr.mxu0 0.0
    %1575 = vmatpush1.msra.mxu0 %v1556
    %1576 = vmatprep.subr.mxu0 0.0
    %1577 = vmatpush1.msra.mxu0 %v1557
    %1578 = vmatprep.subr.mxu0 0.0
    %1579 = vmatpush1.msra.mxu0 %v1558
    %1580 = vmatprep.subr.mxu0 0.0
    %1581 = vmatpush1.msra.mxu0 %v1559
    %1582 = vmatprep.subr.mxu0 0.0
    %1583 = vmatpush1.msra.mxu0 %v1560
    %1584 = vmatprep.subr.mxu0 0.0
    %1585 = vmatpush1.msra.mxu0 %v1561
    %1586 = vmatprep.subr.mxu0 0.0
    %1587 = vmatpush1.msra.mxu0 %v1562
    %1588 = vmatprep.subr.mxu0 0.0
    %1589 = vmatpush1.msra.mxu0 %v1563
    %1590 = vmatprep.subr.mxu0 0.0
    %1591 = vmatpush1.msra.mxu0 %v1564
    %1592 = vmatprep.subr.mxu0 0.0
    %1593 = vmatpush1.msra.mxu0 %v1565
    %1594 = vmatprep.subr.mxu0 0.0
    %1595 = vmatpush1.msra.mxu0 %v1566
    %1596 = vmatprep.subr.mxu0 0.0
    %1597 = vmatpush1.msra.mxu0 %v1567
    %1598 = vmatprep.subr.mxu0 0.0
    %1599 = vmatpush1.msra.mxu0 %v1568
    %1600 = vmatprep.subr.mxu0 0.0
    %1601 = vmatpush1.msra.mxu0 %v1569
    %1602 = vmatprep.subr.mxu0 0.0
    %1603 = vmatpush1.msra.mxu0 %v1570
    %1604 = vmatprep.subr.mxu0 0.0
    %1605 = vmatpush1.msra.mxu0 %v1571
    %1606 = vmatprep.subr.mxu0 0.0
    %1607 = vmatpush1.msra.mxu0 0.0
    %1608 = vmatprep.subr.mxu0 0.0
    %1609 = vmatpush1.msra.mxu0 0.0
    %1610 = vmatprep.subr.mxu0 0.0
    %1611 = vmatpush1.msra.mxu0 0.0
    %1612 = vmatprep.subr.mxu0 0.0
    %1613 = vmatpush1.msra.mxu0 0.0
    %1614 = vmatprep.subr.mxu0 0.0
    %1615 = vmatpush1.msra.mxu0 0.0
    %1616 = vmatprep.subr.mxu0 0.0
    %1617 = vmatpush1.msra.mxu0 0.0
    %1618 = vmatprep.subr.mxu0 0.0
    %1619 = vmatpush1.msra.mxu0 0.0
    %1620 = vmatprep.subr.mxu0 0.0
    %1621 = vmatpush1.msra.mxu0 0.0
    %1622 = vmatprep.subr.mxu0 0.0
    %1623 = vmatpush1.msra.mxu0 0.0
    %1624 = vmatprep.subr.mxu0 0.0
    %1625 = vmatpush1.msra.mxu0 0.0
    %1626 = vmatprep.subr.mxu0 0.0
    %1627 = vmatpush1.msra.mxu0 0.0
    %1628 = vmatprep.subr.mxu0 0.0
    %1629 = vmatpush1.msra.mxu0 0.0
    %1630 = vmatprep.subr.mxu0 0.0
    %1631 = vmatpush1.msra.mxu0 0.0
    %1632 = vmatprep.subr.mxu0 0.0
    %1633 = vmatpush1.msra.mxu0 0.0
    %1634 = vmatprep.subr.mxu0 0.0
    %1635 = vmatpush1.msra.mxu0 0.0
    %1636 = vmatprep.subr.mxu0 0.0
    %1637 = vmatpush1.msra.mxu0 0.0
    %1638 = vmatprep.mubr.f32.mxu0 0.0
    %1639 = vmatmul.mubr.f32.gmra.mrb[0].mxu0 %v1572
    %v1640 = vpop.f32.mrb[0].mxu0
    %v1641 = vadd.f32 0.0, %v1640
    %v1642 = vpop.f32.mrb[0].mxu0
    %1643 = vdwg.mxu0
    %v1644 = vadd.f32 %v1555, %v1641
    %v1645 = vld [vmem:[%s8 + $0x380] sm:$0xff]
    %v1646 = vld [vmem:[%s8 + $0x388] sm:$0xff]
    %v1647 = vld [vmem:[%s8 + $0x390] sm:$0xff]
    %v1648 = vld [vmem:[%s8 + $0x398] sm:$0xff]
    %v1649 = vld [vmem:[%s8 + $0x3a0] sm:$0xff]
    %v1650 = vld [vmem:[%s8 + $0x3a8] sm:$0xff]
    %v1651 = vld [vmem:[%s8 + $0x3b0] sm:$0xff]
    %v1652 = vld [vmem:[%s8 + $0x3b8] sm:$0xff]
    %v1653 = vld [vmem:[%s8 + $0x3c0] sm:$0xff]
    %v1654 = vld [vmem:[%s8 + $0x3c8] sm:$0xff]
    %v1655 = vld [vmem:[%s8 + $0x3d0] sm:$0xff]
    %v1656 = vld [vmem:[%s8 + $0x3d8] sm:$0xff]
    %v1657 = vld [vmem:[%s8 + $0x3e0] sm:$0xff]
    %v1658 = vld [vmem:[%s8 + $0x3e8] sm:$0xff]
    %v1659 = vld [vmem:[%s8 + $0x3f0] sm:$0xff]
    %v1660 = vld [vmem:[%s8 + $0x3f8] sm:$0xff]
    %v1661 = vrot.slane %v1025, 6
    %1663 = vmatprep.subr.mxu0 0.0
    %1664 = vmatpush1.msra.mxu0 %v1645
    %1665 = vmatprep.subr.mxu0 0.0
    %1666 = vmatpush1.msra.mxu0 %v1646
    %1667 = vmatprep.subr.mxu0 0.0
    %1668 = vmatpush1.msra.mxu0 %v1647
    %1669 = vmatprep.subr.mxu0 0.0
    %1670 = vmatpush1.msra.mxu0 %v1648
    %1671 = vmatprep.subr.mxu0 0.0
    %1672 = vmatpush1.msra.mxu0 %v1649
    %1673 = vmatprep.subr.mxu0 0.0
    %1674 = vmatpush1.msra.mxu0 %v1650
    %1675 = vmatprep.subr.mxu0 0.0
    %1676 = vmatpush1.msra.mxu0 %v1651
    %1677 = vmatprep.subr.mxu0 0.0
    %1678 = vmatpush1.msra.mxu0 %v1652
    %1679 = vmatprep.subr.mxu0 0.0
    %1680 = vmatpush1.msra.mxu0 %v1653
    %1681 = vmatprep.subr.mxu0 0.0
    %1682 = vmatpush1.msra.mxu0 %v1654
    %1683 = vmatprep.subr.mxu0 0.0
    %1684 = vmatpush1.msra.mxu0 %v1655
    %1685 = vmatprep.subr.mxu0 0.0
    %1686 = vmatpush1.msra.mxu0 %v1656
    %1687 = vmatprep.subr.mxu0 0.0
    %1688 = vmatpush1.msra.mxu0 %v1657
    %1689 = vmatprep.subr.mxu0 0.0
    %1690 = vmatpush1.msra.mxu0 %v1658
    %1691 = vmatprep.subr.mxu0 0.0
    %1692 = vmatpush1.msra.mxu0 %v1659
    %1693 = vmatprep.subr.mxu0 0.0
    %1694 = vmatpush1.msra.mxu0 %v1660
    %1695 = vmatprep.subr.mxu0 0.0
    %1696 = vmatpush1.msra.mxu0 0.0
    %1697 = vmatprep.subr.mxu0 0.0
    %1698 = vmatpush1.msra.mxu0 0.0
    %1699 = vmatprep.subr.mxu0 0.0
    %1700 = vmatpush1.msra.mxu0 0.0
    %1701 = vmatprep.subr.mxu0 0.0
    %1702 = vmatpush1.msra.mxu0 0.0
    %1703 = vmatprep.subr.mxu0 0.0
    %1704 = vmatpush1.msra.mxu0 0.0
    %1705 = vmatprep.subr.mxu0 0.0
    %1706 = vmatpush1.msra.mxu0 0.0
    %1707 = vmatprep.subr.mxu0 0.0
    %1708 = vmatpush1.msra.mxu0 0.0
    %1709 = vmatprep.subr.mxu0 0.0
    %1710 = vmatpush1.msra.mxu0 0.0
    %1711 = vmatprep.subr.mxu0 0.0
    %1712 = vmatpush1.msra.mxu0 0.0
    %1713 = vmatprep.subr.mxu0 0.0
    %1714 = vmatpush1.msra.mxu0 0.0
    %1715 = vmatprep.subr.mxu0 0.0
    %1716 = vmatpush1.msra.mxu0 0.0
    %1717 = vmatprep.subr.mxu0 0.0
    %1718 = vmatpush1.msra.mxu0 0.0
    %1719 = vmatprep.subr.mxu0 0.0
    %1720 = vmatpush1.msra.mxu0 0.0
    %1721 = vmatprep.subr.mxu0 0.0
    %1722 = vmatpush1.msra.mxu0 0.0
    %1723 = vmatprep.subr.mxu0 0.0
    %1724 = vmatpush1.msra.mxu0 0.0
    %1725 = vmatprep.subr.mxu0 0.0
    %1726 = vmatpush1.msra.mxu0 0.0
    %1727 = vmatprep.mubr.f32.mxu0 0.0
    %1728 = vmatmul.mubr.f32.gmra.mrb[0].mxu0 %v1661
    %v1729 = vpop.f32.mrb[0].mxu0
    %v1730 = vadd.f32 0.0, %v1729
    %v1731 = vpop.f32.mrb[0].mxu0
    %1732 = vdwg.mxu0
    %v1733 = vadd.f32 %v1644, %v1730
    %v1734 = vld [vmem:[%s12 + $0x1] sm:$0x1]
    %v1735 = vlaneseq
    %v1736 = vshrl.u32 %v1735, 7
    %v1737 = vsub.s32 0, %v1736
    %v1738 = vrot.slane %v1734, %v1737
    %v1739 = vadd.f32 %v1733, %v1738
    %v1740 = vmax.f32 %v1739, 0.0
    %v1741 = vld [vmem:[%s9] sm:$0xff]
    %v1742 = vld [vmem:[%s9 + $0x8] sm:$0xff]
    %v1743 = vld [vmem:[%s9 + $0x10] sm:$0xff]
    %v1744 = vld [vmem:[%s9 + $0x18] sm:$0xff]
    %v1745 = vld [vmem:[%s9 + $0x20] sm:$0xff]
    %v1746 = vld [vmem:[%s9 + $0x28] sm:$0xff]
    %v1747 = vld [vmem:[%s9 + $0x30] sm:$0xff]
    %v1748 = vld [vmem:[%s9 + $0x38] sm:$0xff]
    %v1749 = vld [vmem:[%s12 + $0x2] sm:$0x1]
    %v1750 = vlaneseq
    %v1751 = vshrl.u32 %v1750, 7
    %v1752 = vsub.s32 0, %v1751
    %v1753 = vrot.slane %v1749, %v1752
    %1755 = vrot.lane.b32.xlu0 %v1740, 112
    %v1756 = vpop.permute.xlu0 %1755
    %vm1757 = vcmask 523264
    %v1758 = vsel %vm1757, %v1756, 0
    %1760 = vmatprep.subr.mxu0 0.0
    %1761 = vmatpush1.msra.mxu0 %v1741
    %1762 = vmatprep.subr.mxu0 0.0
    %1763 = vmatpush1.msra.mxu0 %v1742
    %1764 = vmatprep.subr.mxu0 0.0
    %1765 = vmatpush1.msra.mxu0 %v1743
    %1766 = vmatprep.subr.mxu0 0.0
    %1767 = vmatpush1.msra.mxu0 %v1744
    %1768 = vmatprep.subr.mxu0 0.0
    %1769 = vmatpush1.msra.mxu0 %v1745
    %1770 = vmatprep.subr.mxu0 0.0
    %1771 = vmatpush1.msra.mxu0 %v1746
    %1772 = vmatprep.subr.mxu0 0.0
    %1773 = vmatpush1.msra.mxu0 %v1747
    %1774 = vmatprep.subr.mxu0 0.0
    %1775 = vmatpush1.msra.mxu0 %v1748
    %1776 = vmatprep.subr.mxu0 0.0
    %1777 = vmatpush1.msra.mxu0 0.0
    %1778 = vmatprep.subr.mxu0 0.0
    %1779 = vmatpush1.msra.mxu0 0.0
    %1780 = vmatprep.subr.mxu0 0.0
    %1781 = vmatpush1.msra.mxu0 0.0
    %1782 = vmatprep.subr.mxu0 0.0
    %1783 = vmatpush1.msra.mxu0 0.0
    %1784 = vmatprep.subr.mxu0 0.0
    %1785 = vmatpush1.msra.mxu0 0.0
    %1786 = vmatprep.subr.mxu0 0.0
    %1787 = vmatpush1.msra.mxu0 0.0
    %1788 = vmatprep.subr.mxu0 0.0
    %1789 = vmatpush1.msra.mxu0 0.0
    %1790 = vmatprep.subr.mxu0 0.0
    %1791 = vmatpush1.msra.mxu0 0.0
    %1792 = vmatprep.subr.mxu0 0.0
    %1793 = vmatpush1.msra.mxu0 0.0
    %1794 = vmatprep.subr.mxu0 0.0
    %1795 = vmatpush1.msra.mxu0 0.0
    %1796 = vmatprep.subr.mxu0 0.0
    %1797 = vmatpush1.msra.mxu0 0.0
    %1798 = vmatprep.subr.mxu0 0.0
    %1799 = vmatpush1.msra.mxu0 0.0
    %1800 = vmatprep.subr.mxu0 0.0
    %1801 = vmatpush1.msra.mxu0 0.0
    %1802 = vmatprep.subr.mxu0 0.0
    %1803 = vmatpush1.msra.mxu0 0.0
    %1804 = vmatprep.subr.mxu0 0.0
    %1805 = vmatpush1.msra.mxu0 0.0
    %1806 = vmatprep.subr.mxu0 0.0
    %1807 = vmatpush1.msra.mxu0 0.0
    %1808 = vmatprep.subr.mxu0 0.0
    %1809 = vmatpush1.msra.mxu0 0.0
    %1810 = vmatprep.subr.mxu0 0.0
    %1811 = vmatpush1.msra.mxu0 0.0
    %1812 = vmatprep.subr.mxu0 0.0
    %1813 = vmatpush1.msra.mxu0 0.0
    %1814 = vmatprep.subr.mxu0 0.0
    %1815 = vmatpush1.msra.mxu0 0.0
    %1816 = vmatprep.subr.mxu0 0.0
    %1817 = vmatpush1.msra.mxu0 0.0
    %1818 = vmatprep.subr.mxu0 0.0
    %1819 = vmatpush1.msra.mxu0 0.0
    %1820 = vmatprep.subr.mxu0 0.0
    %1821 = vmatpush1.msra.mxu0 0.0
    %1822 = vmatprep.subr.mxu0 0.0
    %1823 = vmatpush1.msra.mxu0 0.0
    %1824 = vmatprep.mubr.f32.mxu0 0.0
    %1825 = vmatmul.mubr.f32.gmra.mrb[0].mxu0 %v1758
    %v1826 = vpop.f32.mrb[0].mxu0
    %v1827 = vadd.f32 %v1753, %v1826
    %v1828 = vpop.f32.mrb[0].mxu0
    %1829 = vdwg.mxu0
    %v1830 = vmax.f32 %v1827, 0.0
    %v1831 = vld [vmem:[%s10] sm:$0xff]
    %v1832 = vld [vmem:[%s10 + $0x8] sm:$0xff]
    %v1833 = vld [vmem:[%s10 + $0x10] sm:$0xff]
    %v1834 = vld [vmem:[%s10 + $0x18] sm:$0xff]
    %v1835 = vld [vmem:[%s10 + $0x20] sm:$0xff]
    %v1836 = vld [vmem:[%s10 + $0x28] sm:$0xff]
    %v1837 = vld [vmem:[%s10 + $0x30] sm:$0xff]
    %v1838 = vld [vmem:[%s10 + $0x38] sm:$0xff]
    %v1839 = vld [vmem:[%s12 + $0x3] sm:$0x1]
    %v1840 = vlaneseq
    %v1841 = vshrl.u32 %v1840, 7
    %v1842 = vsub.s32 0, %v1841
    %v1843 = vrot.slane %v1839, %v1842
    %v1845 = vsel %vm1757, %v1830, 0
    %1847 = vmatprep.subr.mxu0 0.0
    %1848 = vmatpush1.msra.mxu0 %v1831
    %1849 = vmatprep.subr.mxu0 0.0
    %1850 = vmatpush1.msra.mxu0 %v1832
    %1851 = vmatprep.subr.mxu0 0.0
    %1852 = vmatpush1.msra.mxu0 %v1833
    %1853 = vmatprep.subr.mxu0 0.0
    %1854 = vmatpush1.msra.mxu0 %v1834
    %1855 = vmatprep.subr.mxu0 0.0
    %1856 = vmatpush1.msra.mxu0 %v1835
    %1857 = vmatprep.subr.mxu0 0.0
    %1858 = vmatpush1.msra.mxu0 %v1836
    %1859 = vmatprep.subr.mxu0 0.0
    %1860 = vmatpush1.msra.mxu0 %v1837
    %1861 = vmatprep.subr.mxu0 0.0
    %1862 = vmatpush1.msra.mxu0 %v1838
    %1863 = vmatprep.subr.mxu0 0.0
    %1864 = vmatpush1.msra.mxu0 0.0
    %1865 = vmatprep.subr.mxu0 0.0
    %1866 = vmatpush1.msra.mxu0 0.0
    %1867 = vmatprep.subr.mxu0 0.0
    %1868 = vmatpush1.msra.mxu0 0.0
    %1869 = vmatprep.subr.mxu0 0.0
    %1870 = vmatpush1.msra.mxu0 0.0
    %1871 = vmatprep.subr.mxu0 0.0
    %1872 = vmatpush1.msra.mxu0 0.0
    %1873 = vmatprep.subr.mxu0 0.0
    %1874 = vmatpush1.msra.mxu0 0.0
    %1875 = vmatprep.subr.mxu0 0.0
    %1876 = vmatpush1.msra.mxu0 0.0
    %1877 = vmatprep.subr.mxu0 0.0
    %1878 = vmatpush1.msra.mxu0 0.0
    %1879 = vmatprep.subr.mxu0 0.0
    %1880 = vmatpush1.msra.mxu0 0.0
    %1881 = vmatprep.subr.mxu0 0.0
    %1882 = vmatpush1.msra.mxu0 0.0
    %1883 = vmatprep.subr.mxu0 0.0
    %1884 = vmatpush1.msra.mxu0 0.0
    %1885 = vmatprep.subr.mxu0 0.0
    %1886 = vmatpush1.msra.mxu0 0.0
    %1887 = vmatprep.subr.mxu0 0.0
    %1888 = vmatpush1.msra.mxu0 0.0
    %1889 = vmatprep.subr.mxu0 0.0
    %1890 = vmatpush1.msra.mxu0 0.0
    %1891 = vmatprep.subr.mxu0 0.0
    %1892 = vmatpush1.msra.mxu0 0.0
    %1893 = vmatprep.subr.mxu0 0.0
    %1894 = vmatpush1.msra.mxu0 0.0
    %1895 = vmatprep.subr.mxu0 0.0
    %1896 = vmatpush1.msra.mxu0 0.0
    %1897 = vmatprep.subr.mxu0 0.0
    %1898 = vmatpush1.msra.mxu0 0.0
    %1899 = vmatprep.subr.mxu0 0.0
    %1900 = vmatpush1.msra.mxu0 0.0
    %1901 = vmatprep.subr.mxu0 0.0
    %1902 = vmatpush1.msra.mxu0 0.0
    %1903 = vmatprep.subr.mxu0 0.0
    %1904 = vmatpush1.msra.mxu0 0.0
    %1905 = vmatprep.subr.mxu0 0.0
    %1906 = vmatpush1.msra.mxu0 0.0
    %1907 = vmatprep.subr.mxu0 0.0
    %1908 = vmatpush1.msra.mxu0 0.0
    %1909 = vmatprep.subr.mxu0 0.0
    %1910 = vmatpush1.msra.mxu0 0.0
    %1911 = vmatprep.mubr.f32.mxu0 0.0
    %1912 = vmatmul.mubr.f32.gmra.mrb[0].mxu0 %v1845
    %v1913 = vpop.f32.mrb[0].mxu0
    %v1914 = vadd.f32 %v1843, %v1913
    %v1915 = vpop.f32.mrb[0].mxu0
    %1916 = vdwg.mxu0
    %v1917 = vld [vmem:[%s11] sm:$0xff]
    %v1918 = vld [vmem:[%s11 + $0x8] sm:$0xff]
    %v1919 = vsel %vm142, %v1740, 0
    %1921 = vmatprep.subr.mxu0 0.0
    %1922 = vmatpush1.msra.mxu0 %v1917
    %1923 = vmatprep.subr.mxu0 0.0
    %1924 = vmatpush1.msra.mxu0 %v1918
    %1925 = vmatprep.subr.mxu0 0.0
    %1926 = vmatpush1.msra.mxu0 0.0
    %1927 = vmatprep.subr.mxu0 0.0
    %1928 = vmatpush1.msra.mxu0 0.0
    %1929 = vmatprep.subr.mxu0 0.0
    %1930 = vmatpush1.msra.mxu0 0.0
    %1931 = vmatprep.subr.mxu0 0.0
    %1932 = vmatpush1.msra.mxu0 0.0
    %1933 = vmatprep.subr.mxu0 0.0
    %1934 = vmatpush1.msra.mxu0 0.0
    %1935 = vmatprep.subr.mxu0 0.0
    %1936 = vmatpush1.msra.mxu0 0.0
    %1937 = vmatprep.subr.mxu0 0.0
    %1938 = vmatpush1.msra.mxu0 0.0
    %1939 = vmatprep.subr.mxu0 0.0
    %1940 = vmatpush1.msra.mxu0 0.0
    %1941 = vmatprep.subr.mxu0 0.0
    %1942 = vmatpush1.msra.mxu0 0.0
    %1943 = vmatprep.subr.mxu0 0.0
    %1944 = vmatpush1.msra.mxu0 0.0
    %1945 = vmatprep.subr.mxu0 0.0
    %1946 = vmatpush1.msra.mxu0 0.0
    %1947 = vmatprep.subr.mxu0 0.0
    %1948 = vmatpush1.msra.mxu0 0.0
    %1949 = vmatprep.subr.mxu0 0.0
    %1950 = vmatpush1.msra.mxu0 0.0
    %1951 = vmatprep.subr.mxu0 0.0
    %1952 = vmatpush1.msra.mxu0 0.0
    %1953 = vmatprep.subr.mxu0 0.0
    %1954 = vmatpush1.msra.mxu0 0.0
    %1955 = vmatprep.subr.mxu0 0.0
    %1956 = vmatpush1.msra.mxu0 0.0
    %1957 = vmatprep.subr.mxu0 0.0
    %1958 = vmatpush1.msra.mxu0 0.0
    %1959 = vmatprep.subr.mxu0 0.0
    %1960 = vmatpush1.msra.mxu0 0.0
    %1961 = vmatprep.subr.mxu0 0.0
    %1962 = vmatpush1.msra.mxu0 0.0
    %1963 = vmatprep.subr.mxu0 0.0
    %1964 = vmatpush1.msra.mxu0 0.0
    %1965 = vmatprep.subr.mxu0 0.0
    %1966 = vmatpush1.msra.mxu0 0.0
    %1967 = vmatprep.subr.mxu0 0.0
    %1968 = vmatpush1.msra.mxu0 0.0
    %1969 = vmatprep.subr.mxu0 0.0
    %1970 = vmatpush1.msra.mxu0 0.0
    %1971 = vmatprep.subr.mxu0 0.0
    %1972 = vmatpush1.msra.mxu0 0.0
    %1973 = vmatprep.subr.mxu0 0.0
    %1974 = vmatpush1.msra.mxu0 0.0
    %1975 = vmatprep.subr.mxu0 0.0
    %1976 = vmatpush1.msra.mxu0 0.0
    %1977 = vmatprep.subr.mxu0 0.0
    %1978 = vmatpush1.msra.mxu0 0.0
    %1979 = vmatprep.subr.mxu0 0.0
    %1980 = vmatpush1.msra.mxu0 0.0
    %1981 = vmatprep.subr.mxu0 0.0
    %1982 = vmatpush1.msra.mxu0 0.0
    %1983 = vmatprep.subr.mxu0 0.0
    %1984 = vmatpush1.msra.mxu0 0.0
    %1985 = vmatprep.mubr.f32.mxu0 0.0
    %1986 = vmatmul.mubr.f32.gmra.mrb[0].mxu0 %v1919
    %v1987 = vpop.f32.mrb[0].mxu0
    %v1988 = vadd.f32 0.0, %v1987
    %v1989 = vpop.f32.mrb[0].mxu0
    %1990 = vdwg.mxu0
    %1992 = vset.pattern.permute.xlu0 0
    %1993 = vperm.xlu0 %1992, %v1914
    %v1994 = vpop.permute.xlu0 %1993
    %v1996 = vadd.f32 %v1994, %v1988
    %1997 = vst [vmem:[#allocation2] sm:$0x3] %v1996
    // Predicated region
    $region54: #{tpu_custom_call.1} parent=1 // pred_check
      _
    $region55: #{tpu_custom_call.1} parent=1 // pred_check_branch
      %1999 = sbr.rel (0) target = $region57
    $region56: #{tpu_custom_call.1} parent=1 // pred_region
      %s2001 = ssub.s32 32, 32
      %2002 = vsyncadd [#allocation3], %s2001
      %s2004 = sshll.u32 [#allocation2], 4
      %s2005 = int_to_ptr.vmem [resolvable:$true] %s2004
      %2007 = dma.vmem_to_hbm [thread:$0]  %s2005, 32, %s13, [#allocation3]
    $region57: #{tpu_custom_call.1} parent=1 // pred_fallthru
      _
    // Predicated region
    $region58: #{tpu_custom_call.1} parent=1 // pred_check
      _
    $region59: #{tpu_custom_call.1} parent=1 // pred_check_branch
      %2009 = sbr.rel (0) target = $region61
    $region60: #{tpu_custom_call.1} parent=1 // pred_region
      %2010 = dma.done [#allocation3], 32
    $region61: #{tpu_custom_call.1} parent=1 // pred_fallthru
      _
    %2011 = vsyncpa [#allocation3], 1

</llo_original>
